<compile_context>
chip_gen: v6e
topology: v6e:2x2x1
jax: 0.10.0
libtpu: 0.0.40
codegen_flags: <defaults>
</compile_context>

<pallas_src>
import jax
import jax.numpy as jnp
from jax.experimental import pallas as pl
from jax.experimental.pallas import tpu as pltpu

SELU_ALPHA = 1.6732632423543772
SELU_SCALE = 1.0507009873554805
BN_EPS = 1e-5
LANES = 128
VMEM_LIMIT = 32 * 1024 * 1024


def _selu(x):
    neg = SELU_ALPHA * (jnp.exp(jnp.minimum(x, 0.0)) - 1.0)
    return SELU_SCALE * jnp.where(x > 0, x, neg)


# ----------------------------- Pallas kernels ------------------------------

def conv_stats_kernel(p_ref, w_ref, y_ref, st_ref):
    # p_ref: (TP, 9C) bf16 patches; w_ref: (9C, C) bf16 weights (pinned).
    # Single fused MXU matmul with f32 accumulation.
    y = jnp.dot(p_ref[...], w_ref[...], preferred_element_type=jnp.float32)
    y_ref[...] = y
    # Per-tile partial BatchNorm statistics (reduced across tiles in wrapper).
    st_ref[0, 0:1, :] = jnp.sum(y, axis=0, keepdims=True)
    st_ref[0, 1:2, :] = jnp.sum(y * y, axis=0, keepdims=True)


def bn_act_kernel(y_ref, sc_ref, sh_ref, o_ref):
    # Lane-dense elementwise epilogue: y*scale + shift, then SELU.
    o_ref[...] = _selu(y_ref[...] * sc_ref[...] + sh_ref[...])


def bn_res_act_kernel(y_ref, sc_ref, sh_ref, r_ref, o_ref):
    o_ref[...] = _selu(y_ref[...] * sc_ref[...] + sh_ref[...] + r_ref[...])


# ------------------------------ call wrappers -------------------------------

def _pick_row_tile(rows, target):
    """Largest multiple-of-8 divisor of `rows` that is <= target (else rows)."""
    t = min(int(target), rows)
    t -= t % 8
    for cand in range(max(t, 8), 7, -8):
        if rows % cand == 0:
            return cand
    return rows


def _conv_stats_call(patches, w_mat):
    P, K = patches.shape          # K = 9*C
    C = w_mat.shape[1]
    tp = _pick_row_tile(P, max(8, min(2048, P // 2 if P >= 16 else P)))
    nt = P // tp

    grid_spec = pltpu.PrefetchScalarGridSpec(
        num_scalar_prefetch=0,
        grid=(nt,),
        in_specs=[
            pl.BlockSpec((tp, K), lambda i: (i, 0)),     # patch row tile
            pl.BlockSpec((K, C), lambda i: (0, 0)),      # weights: VMEM-resident
        ],
        out_specs=(
            pl.BlockSpec((tp, C), lambda i: (i, 0)),     # pre-BN activation
            pl.BlockSpec((1, 2, C), lambda i: (i, 0, 0)),  # per-tile (sum, sumsq)
        ),
    )
    cost = pl.CostEstimate(
        flops=2 * P * K * C,
        transcendentals=0,
        bytes_accessed=P * K * 2 + K * C * 2 + P * C * 4 + nt * 2 * C * 4,
    )
    y, stats = pl.pallas_call(
        conv_stats_kernel,
        out_shape=(
            jax.ShapeDtypeStruct((P, C), jnp.float32),
            jax.ShapeDtypeStruct((nt, 2, C), jnp.float32),
        ),
        grid_spec=grid_spec,
        compiler_params=pltpu.CompilerParams(
            dimension_semantics=("parallel",),
            vmem_limit_bytes=VMEM_LIMIT,
        ),
        cost_estimate=cost,
    )(patches, w_mat)
    return y, stats


def _bn_act_call(y_dense, scale_d, shift_d, residual_dense=None):
    PD, WD = y_dense.shape
    tr = _pick_row_tile(PD, max(8, min(4096, PD // 2 if PD >= 16 else PD)))
    nt = PD // tr

    row_spec = pl.BlockSpec((tr, WD), lambda i: (i, 0))
    vec_spec = pl.BlockSpec((1, WD), lambda i: (0, 0))   # scale/shift pinned

    in_specs = [row_spec, vec_spec, vec_spec]
    args = [y_dense, scale_d, shift_d]
    kernel = bn_act_kernel
    bytes_acc = 2 * PD * WD * 4 + 2 * WD * 4
    if residual_dense is not None:
        in_specs.append(row_spec)
        args.append(residual_dense)
        kernel = bn_res_act_kernel
        bytes_acc += PD * WD * 4

    grid_spec = pltpu.PrefetchScalarGridSpec(
        num_scalar_prefetch=0,
        grid=(nt,),
        in_specs=in_specs,
        out_specs=row_spec,
    )
    cost = pl.CostEstimate(flops=5 * PD * WD, transcendentals=PD * WD,
                           bytes_accessed=bytes_acc)
    return pl.pallas_call(
        kernel,
        out_shape=jax.ShapeDtypeStruct((PD, WD), jnp.float32),
        grid_spec=grid_spec,
        compiler_params=pltpu.CompilerParams(
            dimension_semantics=("parallel",),
            vmem_limit_bytes=VMEM_LIMIT,
        ),
        cost_estimate=cost,
    )(*args)


# --------------------------------- wrapper ----------------------------------

def _im2col_3x3(x_nhwc):
    # Build the (P, 9C) patch matrix (column order (di*3+dj)*C + c), cast to
    # bf16 for the MXU (halves patch HBM traffic vs f32).
    # TODO(synk): build patch tiles in-kernel from a haloed row block to avoid
    # materializing the 9x patch tensor in HBM at all.
    N, H, W, C = x_nhwc.shape
    xp = jnp.pad(x_nhwc, ((0, 0), (1, 1), (1, 1), (0, 0)))
    cols = [xp[:, di:di + H, dj:dj + W, :] for di in range(3) for dj in range(3)]
    patches = jnp.concatenate(cols, axis=-1)           # (N, H, W, 9C)
    return patches.reshape(N * H * W, 9 * C).astype(jnp.bfloat16)


def _conv_bn_layer(x_nhwc, w_mat, gamma, beta, residual_flat=None):
    N, H, W, C = x_nhwc.shape
    P = N * H * W

    # Pass 1: conv matmul + partial BN stats (Pallas).
    y, stats = _conv_stats_call(_im2col_3x3(x_nhwc), w_mat)

    # Finalize BatchNorm2d training-mode stats: tiny (C,)-sized wrapper math.
    sums = jnp.sum(stats, axis=0)                      # (2, C)
    mean = sums[0] / P
    var = jnp.maximum(sums[1] / P - mean * mean, 0.0)  # biased variance
    scale = gamma * jax.lax.rsqrt(var + BN_EPS)
    shift = beta - mean * scale

    # Pass 2: lane-dense normalize + SELU (+ residual) (Pallas).
    fold = LANES // C if (LANES % C == 0 and C <= LANES) else 1
    if fold < 1 or P % fold != 0:
        fold = 1
    PD, WD = P // fold, fold * C
    y_d = y.reshape(PD, WD)
    scale_d = jnp.tile(scale, fold).reshape(1, WD)
    shift_d = jnp.tile(shift, fold).reshape(1, WD)
    res_d = None if residual_flat is None else residual_flat.reshape(PD, WD)
    out = _bn_act_call(y_d, scale_d, shift_d, res_d)
    return out.reshape(N, H, W, C)


@jax.jit
def residual_block_forward(x_nchw, params):
    N, C, H, W = x_nchw.shape
    x_nhwc = jnp.transpose(x_nchw, (0, 2, 3, 1)).astype(jnp.float32)
    x_flat = x_nhwc.reshape(N * H * W, C)

    h1 = _conv_bn_layer(x_nhwc, params["w1"], params["g1"], params["beta1"])
    out = _conv_bn_layer(h1, params["w2"], params["g2"], params["beta2"],
                         residual_flat=x_flat)
    return jnp.transpose(out, (0, 3, 1, 2))            # back to NCHW


# -------------------------------- reference ---------------------------------

def reference_forward(x, w1, b1, w2, b2, matmul_dtype=jnp.float32):
    # Pure-JAX reference (NCHW), mirrors the PyTorch module in training mode.
    def conv(v, w, b):
        y = jax.lax.conv_general_dilated(
            v.astype(matmul_dtype), w.astype(matmul_dtype),
            window_strides=(1, 1), padding="SAME",
            dimension_numbers=("NCHW", "OIHW", "NCHW"),
            preferred_element_type=jnp.float32)
        return y + b.reshape(1, -1, 1, 1)

    def bn(v):
        mean = jnp.mean(v, axis=(0, 2, 3), keepdims=True)
        var = jnp.mean(jnp.square(v - mean), axis=(0, 2, 3), keepdims=True)
        return (v - mean) * jax.lax.rsqrt(var + BN_EPS)

    h = _selu(bn(conv(x, w1, b1)))
    h = bn(conv(h, w2, b2)) + x
    return _selu(h)


if __name__ == "__main__":
    hidden = 32
    N, H, W = 2, 16, 16

    key = jax.random.PRNGKey(0)
    kx, k1, k2, k3, k4 = jax.random.split(key, 5)
    x = jax.random.normal(kx, (N, hidden, H, W), jnp.float32)  # NCHW, like PyTorch

    bound = 1.0 / (hidden * 9) ** 0.5
    w1 = jax.random.uniform(k1, (hidden, hidden, 3, 3), jnp.float32, -bound, bound)
    b1 = jax.random.uniform(k2, (hidden,), jnp.float32, -bound, bound)
    w2 = jax.random.uniform(k3, (hidden, hidden, 3, 3), jnp.float32, -bound, bound)
    b2 = jax.random.uniform(k4, (hidden,), jnp.float32, -bound, bound)

    def to_matmul_weights(w):
        # OIHW -> (9*Cin, Cout) matrix matching the im2col column order; bf16.
        cout, cin = w.shape[0], w.shape[1]
        return jnp.transpose(w, (2, 3, 1, 0)).reshape(9 * cin, cout).astype(jnp.bfloat16)

    params = {
        # Conv biases are intentionally not passed: BN's batch-mean subtraction
        # cancels a per-channel bias exactly (training-mode semantics preserved).
        "w1": to_matmul_weights(w1),
        "g1": jnp.ones((hidden,), jnp.float32),
        "beta1": jnp.zeros((hidden,), jnp.float32),
        "w2": to_matmul_weights(w2),
        "g2": jnp.ones((hidden,), jnp.float32),
        "beta2": jnp.zeros((hidden,), jnp.float32),
    }

    out = jax.block_until_ready(residual_block_forward(x, params))
    assert out.shape == x.shape and out.dtype == jnp.float32

    # Tight check vs a reference that also runs the convs with bf16 operands
    # (f32 accumulation) — same numerics as the kernel's MXU path.
    ref_bf16 = reference_forward(x, w1, b1, w2, b2, matmul_dtype=jnp.bfloat16)
    err_bf16 = float(jnp.max(jnp.abs(out - ref_bf16)))
    assert jnp.allclose(out, ref_bf16, atol=5e-3, rtol=5e-3), err_bf16

    # Loose semantic sanity check vs the full-f32 reference (bf16 matmul noise).
    ref_f32 = reference_forward(x, w1, b1, w2, b2, matmul_dtype=jnp.float32)
    err_f32 = float(jnp.max(jnp.abs(out - ref_f32)))
    assert jnp.allclose(out, ref_f32, atol=1e-1, rtol=1e-1), err_f32

    print("KERNEL_OK")
</pallas_src>

<mosaic_0001>
module attributes {stable_mosaic.version = 11 : i64} {
  func.func @conv_stats_kernel(%arg0: i32, %arg1: memref<256x288xbf16, #tpu.memory_space<vmem>>, %arg2: memref<288x32xbf16, #tpu.memory_space<vmem>>, %arg3: memref<256x32xf32, #tpu.memory_space<vmem>>, %arg4: memref<1x2x32xf32, #tpu.memory_space<vmem>>) attributes {dimension_semantics = [#tpu.dimension_semantics<parallel>], iteration_bounds = array<i64: 2>, scalar_prefetch = 0 : i64, scratch_operands = 0 : i64, tpu.core_type = #tpu.core_type<tc>, window_params = [{transform_indices = @transform_0, window_bounds = array<i64: 256, 288>}, {pipeline_mode = #tpu.pipeline_mode<synchronous>, transform_indices = @transform_1, window_bounds = array<i64: 288, 32>}, {transform_indices = @transform_2, window_bounds = array<i64: 256, 32>}, {transform_indices = @transform_3, window_bounds = array<i64: 1, 2, 32>}]} {
    %c0 = arith.constant 0 : index
    %c0_0 = arith.constant 0 : index
    %0 = vector.load %arg1[%c0, %c0_0] : memref<256x288xbf16, #tpu.memory_space<vmem>>, vector<256x288xbf16>
    %c0_1 = arith.constant 0 : index
    %c0_2 = arith.constant 0 : index
    %1 = vector.load %arg2[%c0_1, %c0_2] : memref<288x32xbf16, #tpu.memory_space<vmem>>, vector<288x32xbf16>
    %cst = arith.constant dense<0.000000e+00> : vector<256x32xf32>
    %2 = tpu.matmul %0, %1, %cst {dimension_numbers = #tpu.dot_dimension_numbers<[1], [0], [0], [1], [0, 0, 1, 1], [], []>} : vector<256x288xbf16>, vector<288x32xbf16>, vector<256x32xf32> -> vector<256x32xf32>
    %c0_3 = arith.constant 0 : index
    %c0_4 = arith.constant 0 : index
    %3 = vector.load %arg3[%c0_3, %c0_4] : memref<256x32xf32, #tpu.memory_space<vmem>>, vector<256x32xf32>
    tpu.vector_store %arg3[%c0_3, %c0_4], %2 {strides = array<i32>} : memref<256x32xf32, #tpu.memory_space<vmem>>, vector<256x32xf32>,
    %cst_5 = arith.constant dense<0.000000e+00> : vector<32xf32>
    %4 = vector.multi_reduction <add>, %2, %cst_5 [0] : vector<256x32xf32> to vector<32xf32>
    %5 = vector.shape_cast %4 : vector<32xf32> to vector<1x32xf32>
    %c0_6 = arith.constant 0 : index
    %c0_7 = arith.constant 0 : index
    %c0_8 = arith.constant 0 : index
    %6 = vector.load %arg4[%c0_6, %c0_7, %c0_8] : memref<1x2x32xf32, #tpu.memory_space<vmem>>, vector<1x1x32xf32>
    %7 = vector.shape_cast %6 : vector<1x1x32xf32> to vector<1x32xf32>
    %8 = vector.shape_cast %5 : vector<1x32xf32> to vector<1x1x32xf32>
    tpu.vector_store %arg4[%c0_6, %c0_7, %c0_8], %8 {strides = array<i32>} : memref<1x2x32xf32, #tpu.memory_space<vmem>>, vector<1x1x32xf32>,
    %9 = arith.mulf %2, %2 : vector<256x32xf32>
    %cst_9 = arith.constant dense<0.000000e+00> : vector<32xf32>
    %10 = vector.multi_reduction <add>, %9, %cst_9 [0] : vector<256x32xf32> to vector<32xf32>
    %11 = vector.shape_cast %10 : vector<32xf32> to vector<1x32xf32>
    %c0_10 = arith.constant 0 : index
    %c1 = arith.constant 1 : index
    %c0_11 = arith.constant 0 : index
    %12 = vector.load %arg4[%c0_10, %c1, %c0_11] : memref<1x2x32xf32, #tpu.memory_space<vmem>>, vector<1x1x32xf32>
    %13 = vector.shape_cast %12 : vector<1x1x32xf32> to vector<1x32xf32>
    %14 = vector.shape_cast %11 : vector<1x32xf32> to vector<1x1x32xf32>
    tpu.vector_store %arg4[%c0_10, %c1, %c0_11], %14 {strides = array<i32>} : memref<1x2x32xf32, #tpu.memory_space<vmem>>, vector<1x1x32xf32>,
    return
  }
  func.func @transform_0(%arg0: i32) -> (i32, i32) {
    %c0_i32 = arith.constant 0 : i32
    %c0_i32_0 = arith.constant 0 : i32
    return %arg0, %c0_i32 : i32, i32
  }
  func.func @transform_1(%arg0: i32) -> (i32, i32) {
    %c0_i32 = arith.constant 0 : i32
    %c0_i32_0 = arith.constant 0 : i32
    %c0_i32_1 = arith.constant 0 : i32
    return %c0_i32, %c0_i32_0 : i32, i32
  }
  func.func @transform_2(%arg0: i32) -> (i32, i32) {
    %c0_i32 = arith.constant 0 : i32
    %c0_i32_0 = arith.constant 0 : i32
    return %arg0, %c0_i32 : i32, i32
  }
  func.func @transform_3(%arg0: i32) -> (i32, i32, i32) {
    %c0_i32 = arith.constant 0 : i32
    %c0_i32_0 = arith.constant 0 : i32
    %c0_i32_1 = arith.constant 0 : i32
    return %arg0, %c0_i32, %c0_i32_0 : i32, i32, i32
  }
}

module attributes {stable_mosaic.version = 11 : i64} {
  func.func @bn_act_kernel(%arg0: i32, %arg1: memref<64x128xf32, #tpu.memory_space<vmem>>, %arg2: memref<1x128xf32, #tpu.memory_space<vmem>>, %arg3: memref<1x128xf32, #tpu.memory_space<vmem>>, %arg4: memref<64x128xf32, #tpu.memory_space<vmem>>) attributes {dimension_semantics = [#tpu.dimension_semantics<parallel>], iteration_bounds = array<i64: 2>, scalar_prefetch = 0 : i64, scratch_operands = 0 : i64, tpu.core_type = #tpu.core_type<tc>, window_params = [{transform_indices = @transform_0, window_bounds = array<i64: 64, 128>}, {pipeline_mode = #tpu.pipeline_mode<synchronous>, transform_indices = @transform_1, window_bounds = array<i64: 1, 128>}, {pipeline_mode = #tpu.pipeline_mode<synchronous>, transform_indices = @transform_2, window_bounds = array<i64: 1, 128>}, {transform_indices = @transform_3, window_bounds = array<i64: 64, 128>}]} {
    %c0 = arith.constant 0 : index
    %c0_0 = arith.constant 0 : index
    %0 = vector.load %arg1[%c0, %c0_0] : memref<64x128xf32, #tpu.memory_space<vmem>>, vector<64x128xf32>
    %c0_1 = arith.constant 0 : index
    %c0_2 = arith.constant 0 : index
    %1 = vector.load %arg2[%c0_1, %c0_2] : memref<1x128xf32, #tpu.memory_space<vmem>>, vector<1x128xf32>
    %2 = vector.broadcast %1 : vector<1x128xf32> to vector<64x128xf32>
    %3 = arith.mulf %0, %2 : vector<64x128xf32>
    %c0_3 = arith.constant 0 : index
    %c0_4 = arith.constant 0 : index
    %4 = vector.load %arg3[%c0_3, %c0_4] : memref<1x128xf32, #tpu.memory_space<vmem>>, vector<1x128xf32>
    %5 = vector.broadcast %4 : vector<1x128xf32> to vector<64x128xf32>
    %6 = arith.addf %3, %5 : vector<64x128xf32>
    %cst = arith.constant 0.000000e+00 : f32
    %7 = vector.broadcast %cst : f32 to vector<64x128xf32>
    %8 = arith.minimumf %6, %7 : vector<64x128xf32>
    %9 = math.exp %8 : vector<64x128xf32>
    %cst_5 = arith.constant 1.000000e+00 : f32
    %10 = vector.broadcast %cst_5 : f32 to vector<64x128xf32>
    %11 = arith.subf %9, %10 : vector<64x128xf32>
    %cst_6 = arith.constant 1.67326319 : f32
    %12 = vector.broadcast %cst_6 : f32 to vector<64x128xf32>
    %13 = arith.mulf %12, %11 : vector<64x128xf32>
    %cst_7 = arith.constant 0.000000e+00 : f32
    %14 = vector.broadcast %cst_7 : f32 to vector<64x128xf32>
    %15 = arith.cmpf ogt, %6, %14 : vector<64x128xf32>
    %16 = arith.select %15, %6, %13 : vector<64x128xi1>, vector<64x128xf32>
    %cst_8 = arith.constant 1.05070102 : f32
    %17 = vector.broadcast %cst_8 : f32 to vector<64x128xf32>
    %18 = arith.mulf %17, %16 : vector<64x128xf32>
    %c0_9 = arith.constant 0 : index
    %c0_10 = arith.constant 0 : index
    %19 = vector.load %arg4[%c0_9, %c0_10] : memref<64x128xf32, #tpu.memory_space<vmem>>, vector<64x128xf32>
    tpu.vector_store %arg4[%c0_9, %c0_10], %18 {strides = array<i32>} : memref<64x128xf32, #tpu.memory_space<vmem>>, vector<64x128xf32>,
    return
  }
  func.func @transform_0(%arg0: i32) -> (i32, i32) {
    %c0_i32 = arith.constant 0 : i32
    %c0_i32_0 = arith.constant 0 : i32
    return %arg0, %c0_i32 : i32, i32
  }
  func.func @transform_1(%arg0: i32) -> (i32, i32) {
    %c0_i32 = arith.constant 0 : i32
    %c0_i32_0 = arith.constant 0 : i32
    %c0_i32_1 = arith.constant 0 : i32
    return %c0_i32, %c0_i32_0 : i32, i32
  }
  func.func @transform_2(%arg0: i32) -> (i32, i32) {
    %c0_i32 = arith.constant 0 : i32
    %c0_i32_0 = arith.constant 0 : i32
    %c0_i32_1 = arith.constant 0 : i32
    return %c0_i32, %c0_i32_0 : i32, i32
  }
  func.func @transform_3(%arg0: i32) -> (i32, i32) {
    %c0_i32 = arith.constant 0 : i32
    %c0_i32_0 = arith.constant 0 : i32
    return %arg0, %c0_i32 : i32, i32
  }
}

module attributes {stable_mosaic.version = 11 : i64} {
  func.func @bn_res_act_kernel(%arg0: i32, %arg1: memref<64x128xf32, #tpu.memory_space<vmem>>, %arg2: memref<1x128xf32, #tpu.memory_space<vmem>>, %arg3: memref<1x128xf32, #tpu.memory_space<vmem>>, %arg4: memref<64x128xf32, #tpu.memory_space<vmem>>, %arg5: memref<64x128xf32, #tpu.memory_space<vmem>>) attributes {dimension_semantics = [#tpu.dimension_semantics<parallel>], iteration_bounds = array<i64: 2>, scalar_prefetch = 0 : i64, scratch_operands = 0 : i64, tpu.core_type = #tpu.core_type<tc>, window_params = [{transform_indices = @transform_0, window_bounds = array<i64: 64, 128>}, {pipeline_mode = #tpu.pipeline_mode<synchronous>, transform_indices = @transform_1, window_bounds = array<i64: 1, 128>}, {pipeline_mode = #tpu.pipeline_mode<synchronous>, transform_indices = @transform_2, window_bounds = array<i64: 1, 128>}, {transform_indices = @transform_3, window_bounds = array<i64: 64, 128>}, {transform_indices = @transform_4, window_bounds = array<i64: 64, 128>}]} {
    %c0 = arith.constant 0 : index
    %c0_0 = arith.constant 0 : index
    %0 = vector.load %arg1[%c0, %c0_0] : memref<64x128xf32, #tpu.memory_space<vmem>>, vector<64x128xf32>
    %c0_1 = arith.constant 0 : index
    %c0_2 = arith.constant 0 : index
    %1 = vector.load %arg2[%c0_1, %c0_2] : memref<1x128xf32, #tpu.memory_space<vmem>>, vector<1x128xf32>
    %2 = vector.broadcast %1 : vector<1x128xf32> to vector<64x128xf32>
    %3 = arith.mulf %0, %2 : vector<64x128xf32>
    %c0_3 = arith.constant 0 : index
    %c0_4 = arith.constant 0 : index
    %4 = vector.load %arg3[%c0_3, %c0_4] : memref<1x128xf32, #tpu.memory_space<vmem>>, vector<1x128xf32>
    %5 = vector.broadcast %4 : vector<1x128xf32> to vector<64x128xf32>
    %6 = arith.addf %3, %5 : vector<64x128xf32>
    %c0_5 = arith.constant 0 : index
    %c0_6 = arith.constant 0 : index
    %7 = vector.load %arg4[%c0_5, %c0_6] : memref<64x128xf32, #tpu.memory_space<vmem>>, vector<64x128xf32>
    %8 = arith.addf %6, %7 : vector<64x128xf32>
    %cst = arith.constant 0.000000e+00 : f32
    %9 = vector.broadcast %cst : f32 to vector<64x128xf32>
    %10 = arith.minimumf %8, %9 : vector<64x128xf32>
    %11 = math.exp %10 : vector<64x128xf32>
    %cst_7 = arith.constant 1.000000e+00 : f32
    %12 = vector.broadcast %cst_7 : f32 to vector<64x128xf32>
    %13 = arith.subf %11, %12 : vector<64x128xf32>
    %cst_8 = arith.constant 1.67326319 : f32
    %14 = vector.broadcast %cst_8 : f32 to vector<64x128xf32>
    %15 = arith.mulf %14, %13 : vector<64x128xf32>
    %cst_9 = arith.constant 0.000000e+00 : f32
    %16 = vector.broadcast %cst_9 : f32 to vector<64x128xf32>
    %17 = arith.cmpf ogt, %8, %16 : vector<64x128xf32>
    %18 = arith.select %17, %8, %15 : vector<64x128xi1>, vector<64x128xf32>
    %cst_10 = arith.constant 1.05070102 : f32
    %19 = vector.broadcast %cst_10 : f32 to vector<64x128xf32>
    %20 = arith.mulf %19, %18 : vector<64x128xf32>
    %c0_11 = arith.constant 0 : index
    %c0_12 = arith.constant 0 : index
    %21 = vector.load %arg5[%c0_11, %c0_12] : memref<64x128xf32, #tpu.memory_space<vmem>>, vector<64x128xf32>
    tpu.vector_store %arg5[%c0_11, %c0_12], %20 {strides = array<i32>} : memref<64x128xf32, #tpu.memory_space<vmem>>, vector<64x128xf32>,
    return
  }
  func.func @transform_0(%arg0: i32) -> (i32, i32) {
    %c0_i32 = arith.constant 0 : i32
    %c0_i32_0 = arith.constant 0 : i32
    return %arg0, %c0_i32 : i32, i32
  }
  func.func @transform_1(%arg0: i32) -> (i32, i32) {
    %c0_i32 = arith.constant 0 : i32
    %c0_i32_0 = arith.constant 0 : i32
    %c0_i32_1 = arith.constant 0 : i32
    return %c0_i32, %c0_i32_0 : i32, i32
  }
  func.func @transform_2(%arg0: i32) -> (i32, i32) {
    %c0_i32 = arith.constant 0 : i32
    %c0_i32_0 = arith.constant 0 : i32
    %c0_i32_1 = arith.constant 0 : i32
    return %c0_i32, %c0_i32_0 : i32, i32
  }
  func.func @transform_3(%arg0: i32) -> (i32, i32) {
    %c0_i32 = arith.constant 0 : i32
    %c0_i32_0 = arith.constant 0 : i32
    return %arg0, %c0_i32 : i32, i32
  }
  func.func @transform_4(%arg0: i32) -> (i32, i32) {
    %c0_i32 = arith.constant 0 : i32
    %c0_i32_0 = arith.constant 0 : i32
    return %arg0, %c0_i32 : i32, i32
  }
}

</mosaic_0001>

<llo_original>
// kernel: tile.23
$region0: #{tile.23}
  #allocation0 [shape = 's32[1]{0}', space=sflag, size = 0x4, scoped, tag = 'scoped memory for tile.23']
  %s0 = inlined_call_operand.vmem [shape: f32[32], index: 0, kind: input, shape index: {}]
  %s1 = inlined_call_operand.vmem [shape: f32[4,32], index: 1, kind: output, shape index: {}]
  // Predicated region
  $region2: #{tile.23} parent=0 // pred_check
    _
  $region3: #{tile.23} parent=0 // pred_check_branch
    %3 = sbr.rel (0) target = $region5
  $region4: #{tile.23} parent=0 // pred_region
    _
  $region5: #{tile.23} parent=0 // pred_fallthru
    _
  %v4 = vld [vmem:[%s0] ss:$0 sm:$0xff]
  %5 = vst [vmem:[%s1] sm:$0xf] %v4

// kernel: tile.24
$region0: #{tile.24}
  %s0 = inlined_call_operand.vmem [shape: f32[4,32], index: 0, kind: input, shape index: {}]
  %s1 = inlined_call_operand.vmem [shape: f32[1,128], index: 1, kind: output, shape index: {}]
  $region1: #{tile.24} parent=0
    #allocation0 [shape = 'u8[4096]{0}', space=vmem, size = 0x1000, scoped, tag = 'scoped mem for output reshape']
    #allocation1 [shape = 'u8[4096]{0}', space=vmem, size = 0x1000, scoped, tag = 'scoped mem for input reshape']
    %s3 = sshll.u32 1, 4
    %s4 = ssub.s32 %s3, 1
    %v5 = vld [vmem:[%s0] sm:%s4]
    %6 = vst [vmem:[#allocation1] sm:%s4] %v5
    %v7 = vld [vmem:[#allocation1] sm:$0x1]
    %vm8 = vcmask 261120
    %9 = vst.msk [vmem:[#allocation0] sm:$0x1] %vm8, %v7
    %s10 = scalar_lea.vmem [#allocation1], 3
    %v11 = vld [vmem:[%s10] sm:$0x1]
    %12 = vrot.lane.b32.xlu0 %v11, 96
    %v13 = vpop.permute.xlu0 %12
    %vm14 = vcmask 1048320
    %15 = vst.msk [vmem:[#allocation0] sm:$0x1] %vm14, %v13
    %s16 = scalar_lea.vmem [#allocation1], 2
    %v17 = vld [vmem:[%s16] sm:$0x1]
    %18 = vrot.lane.b32.xlu0 %v17, 64
    %v19 = vpop.permute.xlu0 %18
    %vm20 = vcmask 785920
    %21 = vst.msk [vmem:[#allocation0] sm:$0x1] %vm20, %v19
    %s22 = scalar_lea.vmem [#allocation1], 1
    %v23 = vld [vmem:[%s22] sm:$0x1]
    %24 = vrot.lane.b32.xlu0 %v23, 32
    %v25 = vpop.permute.xlu0 %24
    %vm26 = vcmask 523520
    %27 = vst.msk [vmem:[#allocation0] sm:$0x1] %vm26, %v25
    %s29 = sshll.u32 1, 1
    %s30 = ssub.s32 %s29, 1
    %v32 = vld [vmem:[#allocation0] sm:%s30]
    %s33 = sshll.u32 1, 1
    %s34 = ssub.s32 %s33, 1
    %35 = vst [vmem:[%s1] sm:%s34] %v32

// kernel: residual_block_forward.4
$region0: #{residual_block_forward.4}
  #allocation0 [shape = 'u32[]', space=smem, size = 0x4, offset = 0x4, fixed_abs, tag = 'smem constant byte address 0x4 - core index']
  #allocation1 [shape = 'u32[144,128]{1,0:T(1,128)}', space=vmem, size = 0x12000, scoped, tag = 'internal scratch']
  %s0 = inlined_call_operand.vmem [shape: bf16[512,288], index: 0, kind: input, shape index: {}]
  %s1 = inlined_call_operand.vmem [shape: bf16[288,32], index: 1, kind: input, shape index: {}]
  %s2 = inlined_call_operand.vmem [shape: f32[512,32], index: 2, kind: output, shape index: {0}]
  %s3 = inlined_call_operand.vmem [shape: f32[2,2,32], index: 3, kind: output, shape index: {1}]
  %4 = xla_tuple %s2, %s3
  %s5 = sld [smem:[#allocation0]]
  $region49: #{residual_block_forward.4} parent=0
    _
  %s7 = ssub.s32 1, %s5
  %s8 = scalar_select 0, %s7, %s5
  loop: start=0, step=1, limit=4
  $region2: #{residual_block_forward.4} parent=0 // loop_pre_header
    _
  $region3: #{residual_block_forward.4} parent=0 // loop_header
    %s10 = sphi 0, %s14
    %p11 = scmp.ge.s32.totalorder %s10, 4
    %s20 = sphi 0, %s22
    %s23 = sphi 0, %s20
    %s24 = sphi 0, %s23
    %s40 = sphi 0, %s24
    %s44 = sphi 0, %s44
    %s46 = sphi 0, %s44
    %s47 = sphi 0, %s46
    %s61 = sphi 0, %s47
    %s67 = sphi 0, %s69
    %s70 = sphi 0, %s67
    %s71 = sphi 0, %s70
    %s87 = sphi 0, %s71
    %s93 = sphi 0, %s95
    %s96 = sphi 0, %s93
    %s97 = sphi 0, %s96
    %s113 = sphi 0, %s97
  $region4: #{residual_block_forward.4} parent=0 // loop_header_branch
    %13 = sbr.rel (%p11) target = $region8
  $region5: #{residual_block_forward.4} parent=0 // loop_body
    %s15 = ssub.s32 %s10, 1
    %s16 = ssub.s32 %s10, 2
    %s17 = sadd.s32 %s10, 1
    %s18 = ssub.s32 %s10, %s17
    %p19 = scmp.eq.s32.totalorder %s18, 0
    %s21 = sadd.s32 %s20, 1
    %s22 = scalar_select %p19, %s20, %s21
    %p25 = pneg %p19
    %p26 = scmp.eq.s32.totalorder %s10, 1
    %p27 = por %p25, %p26
    %p28 = scmp.ne.s32.totalorder %s20, %s23
    %p29 = scmp.eq.s32.totalorder %s10, 0
    %p30 = por %p28, %p29
    %p31 = scmp.ne.s32.totalorder %s20, %s23
    %p32 = scmp.eq.s32.totalorder %s15, 1
    %p33 = por %p31, %p32
    %p34 = scmp.ne.s32.totalorder %s23, %s24
    %p35 = scmp.eq.s32.totalorder %s15, 0
    %p36 = por %p34, %p35
    %p37 = scmp.ne.s32.totalorder %s23, %s24
    %p38 = scmp.eq.s32.totalorder %s16, 1
    %p39 = por %p37, %p38
    %p41 = scmp.ne.s32.totalorder %s24, %s40
    %p42 = scmp.eq.s32.totalorder %s16, 0
    %p43 = por %p41, %p42
    %s45 = sadd.s32 %s44, 1
    %p48 = scmp.eq.s32.totalorder %s10, 1
    %p49 = scmp.ne.s32.totalorder %s44, %s46
    %p50 = scmp.eq.s32.totalorder %s10, 0
    %p51 = por %p49, %p50
    %p52 = scmp.ne.s32.totalorder %s44, %s46
    %p53 = scmp.eq.s32.totalorder %s15, 1
    %p54 = por %p52, %p53
    %p55 = scmp.ne.s32.totalorder %s46, %s47
    %p56 = scmp.eq.s32.totalorder %s15, 0
    %p57 = por %p55, %p56
    %p58 = scmp.ne.s32.totalorder %s46, %s47
    %p59 = scmp.eq.s32.totalorder %s16, 1
    %p60 = por %p58, %p59
    %p62 = scmp.ne.s32.totalorder %s47, %s61
    %p63 = scmp.eq.s32.totalorder %s16, 0
    %p64 = por %p62, %p63
    %s65 = ssub.s32 %s10, %s17
    %p66 = scmp.eq.s32.totalorder %s65, 0
    %s68 = sadd.s32 %s67, 1
    %s69 = scalar_select %p66, %s67, %s68
    %p72 = pneg %p66
    %p73 = scmp.eq.s32.totalorder %s10, 1
    %p74 = por %p72, %p73
    %p75 = scmp.ne.s32.totalorder %s67, %s70
    %p76 = scmp.eq.s32.totalorder %s10, 0
    %p77 = por %p75, %p76
    %p78 = scmp.ne.s32.totalorder %s67, %s70
    %p79 = scmp.eq.s32.totalorder %s15, 1
    %p80 = por %p78, %p79
    %p81 = scmp.ne.s32.totalorder %s70, %s71
    %p82 = scmp.eq.s32.totalorder %s15, 0
    %p83 = por %p81, %p82
    %p84 = scmp.ne.s32.totalorder %s70, %s71
    %p85 = scmp.eq.s32.totalorder %s16, 1
    %p86 = por %p84, %p85
    %p88 = scmp.ne.s32.totalorder %s71, %s87
    %p89 = scmp.eq.s32.totalorder %s16, 0
    %p90 = por %p88, %p89
    %s91 = ssub.s32 %s10, %s17
    %p92 = scmp.eq.s32.totalorder %s91, 0
    %s94 = sadd.s32 %s93, 1
    %s95 = scalar_select %p92, %s93, %s94
    %p98 = pneg %p92
    %p99 = scmp.eq.s32.totalorder %s10, 1
    %p100 = por %p98, %p99
    %p101 = scmp.ne.s32.totalorder %s93, %s96
    %p102 = scmp.eq.s32.totalorder %s10, 0
    %p103 = por %p101, %p102
    %p104 = scmp.ne.s32.totalorder %s93, %s96
    %p105 = scmp.eq.s32.totalorder %s15, 1
    %p106 = por %p104, %p105
    %p107 = scmp.ne.s32.totalorder %s96, %s97
    %p108 = scmp.eq.s32.totalorder %s15, 0
    %p109 = por %p107, %p108
    %p110 = scmp.ne.s32.totalorder %s96, %s97
    %p111 = scmp.eq.s32.totalorder %s16, 1
    %p112 = por %p110, %p111
    %p114 = scmp.ne.s32.totalorder %s97, %s113
    %p115 = scmp.eq.s32.totalorder %s16, 0
    %p116 = por %p114, %p115
    %p117 = scmp.le.s32.totalorder 1, %s10
    %p118 = scmp.lt.s32.totalorder %s10, 3
    %p119 = pnand %p117, %p118
    %p120 = pneg %p119
    // Predicated region
    $region9: #{residual_block_forward.4} parent=5 // pred_check
      _
    $region10: #{residual_block_forward.4} parent=5 // pred_check_branch
      %122 = sbr.rel (%p119) target = $region12
    $region11: #{residual_block_forward.4} parent=5 // pred_region
      %s123 = ssub.s32 %s10, 1
      // Predicated region
      $region13: #{residual_block_forward.4} parent=11 // pred_check
        %p124 = pneg %p57
      $region14: #{residual_block_forward.4} parent=11 // pred_check_branch
        %126 = sbr.rel (%p124) target = $region16
      $region15: #{residual_block_forward.4} parent=11 // pred_region
        _
      $region16: #{residual_block_forward.4} parent=11 // pred_fallthru
        _
    $region12: #{residual_block_forward.4} parent=5 // pred_fallthru
      _
    %p127 = scmp.lt.s32.totalorder %s10, 2
    // Predicated region
    $region17: #{residual_block_forward.4} parent=5 // pred_check
      %p128 = pneg %p127
    $region18: #{residual_block_forward.4} parent=5 // pred_check_branch
      %130 = sbr.rel (%p128) target = $region20
    $region19: #{residual_block_forward.4} parent=5 // pred_region
      // Predicated region
      $region21: #{residual_block_forward.4} parent=19 // pred_check
        %p131 = pneg %p30
      $region22: #{residual_block_forward.4} parent=19 // pred_check_branch
        %133 = sbr.rel (%p131) target = $region24
      $region23: #{residual_block_forward.4} parent=19 // pred_region
        %s134 = smul.u32 32, %s10
        %p135 = scmp.lt.s32.totalorder %s134, 63
        %s136 = scalar_select %p135, %s134, 63
        %s137 = smul.addr %s136, 3
        %s138 = smul.addr %s137, 4
        %s139 = scalar_lea.vmem %s0, %s138
        %s140 = smul.u32 32, %s10
      $region24: #{residual_block_forward.4} parent=19 // pred_fallthru
        _
    $region20: #{residual_block_forward.4} parent=5 // pred_fallthru
      _
    %p141 = scmp.le.s32.totalorder 1, %s10
    %p142 = scmp.lt.s32.totalorder %s10, 3
    %p143 = pnand %p141, %p142
    %p144 = pneg %p143
    // Predicated region
    $region25: #{residual_block_forward.4} parent=5 // pred_check
      _
    $region26: #{residual_block_forward.4} parent=5 // pred_check_branch
      %146 = sbr.rel (%p143) target = $region28
    $region27: #{residual_block_forward.4} parent=5 // pred_region
      %s147 = ssub.s32 %s10, 1
      %s148 = smul.u32 32, %s15
      %p149 = scmp.lt.s32.totalorder %s148, 63
      %s150 = scalar_select %p149, %s148, 63
      %s151 = smul.addr %s150, 3
      %s152 = smul.addr %s151, 4
      %s153 = scalar_lea.vmem %s0, %s152
      %p154 = pneg %p36
      %p155 = pneg %p33
      %p156 = pneg %p57
      %p157 = pneg %p54
      %p158 = pneg %p83
      %p159 = pneg %p80
      %s160 = smul.u32 32, %s15
      %p161 = scmp.lt.s32.totalorder %s160, 63
      %s162 = scalar_select %p161, %s160, 63
      %s163 = smul.addr %s162, 8
      %s164 = scalar_lea.vmem %s2, %s163
      %p165 = pneg %p109
      %p166 = pneg %p106
      %p167 = scmp.lt.s32.totalorder %s15, 1
      %s168 = scalar_select %p167, %s15, 1
      %s169 = smul.addr %s168, 2
      %s170 = scalar_lea.vmem %s3, %s169
      %s171 = smul.u32 32, %s15
      %p172 = scmp.lt.s32.totalorder %s171, 63
      %s173 = scalar_select %p172, %s171, 63
      %s174 = smul.addr %s173, 3
      %s175 = smul.addr %s174, 4
      %s176 = scalar_lea.vmem %s0, %s175
      %s177 = smul.u32 32, %s15
      %s178 = smul.u32 32, %s15
      %p179 = scmp.lt.s32.totalorder %s178, 63
      %s180 = scalar_select %p179, %s178, 63
      %s181 = smul.addr %s180, 8
      %s182 = scalar_lea.vmem %s2, %s181
      %s183 = smul.u32 32, %s15
      %p184 = scmp.lt.s32.totalorder %s15, 1
      %s185 = scalar_select %p184, %s15, 1
      %s186 = smul.addr %s185, 2
      %s187 = scalar_lea.vmem %s3, %s186
      %v189 = vld [vmem:[%s176] sm:$0xff]
      %v190 = vld [vmem:[%s176 + $0x8] sm:$0xf]
      %v191 = vld [vmem:[%s176 + $0xc] sm:$0xff]
      %v192 = vld [vmem:[%s176 + $0x14] sm:$0xf]
      %v193 = vld [vmem:[%s176 + $0x18] sm:$0xff]
      %v194 = vld [vmem:[%s176 + $0x20] sm:$0xf]
      %v195 = vld [vmem:[%s176 + $0x24] sm:$0xff]
      %v196 = vld [vmem:[%s176 + $0x2c] sm:$0xf]
      %v197 = vld [vmem:[%s176 + $0x30] sm:$0xff]
      %v198 = vld [vmem:[%s176 + $0x38] sm:$0xf]
      %v199 = vld [vmem:[%s176 + $0x3c] sm:$0xff]
      %v200 = vld [vmem:[%s176 + $0x44] sm:$0xf]
      %v201 = vld [vmem:[%s176 + $0x48] sm:$0xff]
      %v202 = vld [vmem:[%s176 + $0x50] sm:$0xf]
      %v203 = vld [vmem:[%s176 + $0x54] sm:$0xff]
      %v204 = vld [vmem:[%s176 + $0x5c] sm:$0xf]
      %v205 = vld [vmem:[%s176 + $0x60] sm:$0xff]
      %v206 = vld [vmem:[%s176 + $0x68] sm:$0xf]
      %v207 = vld [vmem:[%s176 + $0x6c] sm:$0xff]
      %v208 = vld [vmem:[%s176 + $0x74] sm:$0xf]
      %v209 = vld [vmem:[%s176 + $0x78] sm:$0xff]
      %v210 = vld [vmem:[%s176 + $0x80] sm:$0xf]
      %v211 = vld [vmem:[%s176 + $0x84] sm:$0xff]
      %v212 = vld [vmem:[%s176 + $0x8c] sm:$0xf]
      %v213 = vld [vmem:[%s176 + $0x90] sm:$0xff]
      %v214 = vld [vmem:[%s176 + $0x98] sm:$0xf]
      %v215 = vld [vmem:[%s176 + $0x9c] sm:$0xff]
      %v216 = vld [vmem:[%s176 + $0xa4] sm:$0xf]
      %v217 = vld [vmem:[%s176 + $0xa8] sm:$0xff]
      %v218 = vld [vmem:[%s176 + $0xb0] sm:$0xf]
      %v219 = vld [vmem:[%s176 + $0xb4] sm:$0xff]
      %v220 = vld [vmem:[%s176 + $0xbc] sm:$0xf]
      %v221 = vld [vmem:[%s176 + $0xc0] sm:$0xff]
      %v222 = vld [vmem:[%s176 + $0xc8] sm:$0xf]
      %v223 = vld [vmem:[%s176 + $0xcc] sm:$0xff]
      %v224 = vld [vmem:[%s176 + $0xd4] sm:$0xf]
      %v225 = vld [vmem:[%s176 + $0xd8] sm:$0xff]
      %v226 = vld [vmem:[%s176 + $0xe0] sm:$0xf]
      %v227 = vld [vmem:[%s176 + $0xe4] sm:$0xff]
      %v228 = vld [vmem:[%s176 + $0xec] sm:$0xf]
      %v229 = vld [vmem:[%s176 + $0xf0] sm:$0xff]
      %v230 = vld [vmem:[%s176 + $0xf8] sm:$0xf]
      %v231 = vld [vmem:[%s176 + $0xfc] sm:$0xff]
      %v232 = vld [vmem:[%s176 + $0x104] sm:$0xf]
      %v233 = vld [vmem:[%s176 + $0x108] sm:$0xff]
      %v234 = vld [vmem:[%s176 + $0x110] sm:$0xf]
      %v235 = vld [vmem:[%s176 + $0x114] sm:$0xff]
      %v236 = vld [vmem:[%s176 + $0x11c] sm:$0xf]
      %v237 = vld [vmem:[%s176 + $0x120] sm:$0xff]
      %v238 = vld [vmem:[%s176 + $0x128] sm:$0xf]
      %v239 = vld [vmem:[%s176 + $0x12c] sm:$0xff]
      %v240 = vld [vmem:[%s176 + $0x134] sm:$0xf]
      %v241 = vld [vmem:[%s176 + $0x138] sm:$0xff]
      %v242 = vld [vmem:[%s176 + $0x140] sm:$0xf]
      %v243 = vld [vmem:[%s176 + $0x144] sm:$0xff]
      %v244 = vld [vmem:[%s176 + $0x14c] sm:$0xf]
      %v245 = vld [vmem:[%s176 + $0x150] sm:$0xff]
      %v246 = vld [vmem:[%s176 + $0x158] sm:$0xf]
      %v247 = vld [vmem:[%s176 + $0x15c] sm:$0xff]
      %v248 = vld [vmem:[%s176 + $0x164] sm:$0xf]
      %v249 = vld [vmem:[%s176 + $0x168] sm:$0xff]
      %v250 = vld [vmem:[%s176 + $0x170] sm:$0xf]
      %v251 = vld [vmem:[%s176 + $0x174] sm:$0xff]
      %v252 = vld [vmem:[%s176 + $0x17c] sm:$0xf]
      %v253 = vld [vmem:[%s1] sm:$0xf]
      %v254 = vld [vmem:[%s1 + $0x4] sm:$0xf]
      %v255 = vld [vmem:[%s1 + $0x8] sm:$0xf]
      %v256 = vld [vmem:[%s1 + $0xc] sm:$0xf]
      %v257 = vld [vmem:[%s1 + $0x10] sm:$0xf]
      %v258 = vld [vmem:[%s1 + $0x14] sm:$0xf]
      %v259 = vld [vmem:[%s1 + $0x18] sm:$0xf]
      %v260 = vld [vmem:[%s1 + $0x1c] sm:$0xf]
      %v261 = vld [vmem:[%s1 + $0x20] sm:$0xf]
      %v262 = vld [vmem:[%s1 + $0x24] sm:$0xf]
      %v263 = vld [vmem:[%s1 + $0x28] sm:$0xf]
      %v264 = vld [vmem:[%s1 + $0x2c] sm:$0xf]
      %v265 = vld [vmem:[%s1 + $0x30] sm:$0xf]
      %v266 = vld [vmem:[%s1 + $0x34] sm:$0xf]
      %v267 = vld [vmem:[%s1 + $0x38] sm:$0xf]
      %v268 = vld [vmem:[%s1 + $0x3c] sm:$0xf]
      %v269 = vld [vmem:[%s1 + $0x40] sm:$0xf]
      %v270 = vld [vmem:[%s1 + $0x44] sm:$0xf]
      %v271 = vld [vmem:[%s1 + $0x48] sm:$0xf]
      %v272 = vld [vmem:[%s1 + $0x4c] sm:$0xf]
      %v273 = vld [vmem:[%s1 + $0x50] sm:$0xf]
      %v274 = vld [vmem:[%s1 + $0x54] sm:$0xf]
      %v275 = vld [vmem:[%s1 + $0x58] sm:$0xf]
      %v276 = vld [vmem:[%s1 + $0x5c] sm:$0xf]
      %v277 = vld [vmem:[%s1 + $0x60] sm:$0xf]
      %v278 = vld [vmem:[%s1 + $0x64] sm:$0xf]
      %v279 = vld [vmem:[%s1 + $0x68] sm:$0xf]
      %v280 = vld [vmem:[%s1 + $0x6c] sm:$0xf]
      %v281 = vld [vmem:[%s1 + $0x70] sm:$0xf]
      %v282 = vld [vmem:[%s1 + $0x74] sm:$0xf]
      %v283 = vld [vmem:[%s1 + $0x78] sm:$0xf]
      %v284 = vld [vmem:[%s1 + $0x7c] sm:$0xf]
      %v285 = vld [vmem:[%s1 + $0x80] sm:$0xf]
      %v286 = vld [vmem:[%s1 + $0x84] sm:$0xf]
      %v287 = vld [vmem:[%s1 + $0x88] sm:$0xf]
      %v288 = vld [vmem:[%s1 + $0x8c] sm:$0xf]
      %v353 = vunpack.c.l.b16 %v189
      %v354 = vunpack.c.h.b16 %v189
      %v355 = vunpack.c.l.b16 %v190
      %v356 = vunpack.c.l.b16 %v191
      %v357 = vunpack.c.h.b16 %v191
      %v358 = vunpack.c.l.b16 %v192
      %v359 = vunpack.c.l.b16 %v193
      %v360 = vunpack.c.h.b16 %v193
      %v361 = vunpack.c.l.b16 %v194
      %v362 = vunpack.c.l.b16 %v195
      %v363 = vunpack.c.h.b16 %v195
      %v364 = vunpack.c.l.b16 %v196
      %v365 = vunpack.c.l.b16 %v197
      %v366 = vunpack.c.h.b16 %v197
      %v367 = vunpack.c.l.b16 %v198
      %v368 = vunpack.c.l.b16 %v199
      %v369 = vunpack.c.h.b16 %v199
      %v370 = vunpack.c.l.b16 %v200
      %v371 = vunpack.c.l.b16 %v201
      %v372 = vunpack.c.h.b16 %v201
      %v373 = vunpack.c.l.b16 %v202
      %v374 = vunpack.c.l.b16 %v203
      %v375 = vunpack.c.h.b16 %v203
      %v376 = vunpack.c.l.b16 %v204
      %v377 = vunpack.c.l.b16 %v205
      %v378 = vunpack.c.h.b16 %v205
      %v379 = vunpack.c.l.b16 %v206
      %v380 = vunpack.c.l.b16 %v207
      %v381 = vunpack.c.h.b16 %v207
      %v382 = vunpack.c.l.b16 %v208
      %v383 = vunpack.c.l.b16 %v209
      %v384 = vunpack.c.h.b16 %v209
      %v385 = vunpack.c.l.b16 %v210
      %v386 = vunpack.c.l.b16 %v211
      %v387 = vunpack.c.h.b16 %v211
      %v388 = vunpack.c.l.b16 %v212
      %v389 = vunpack.c.l.b16 %v213
      %v390 = vunpack.c.h.b16 %v213
      %v391 = vunpack.c.l.b16 %v214
      %v392 = vunpack.c.l.b16 %v215
      %v393 = vunpack.c.h.b16 %v215
      %v394 = vunpack.c.l.b16 %v216
      %v395 = vunpack.c.l.b16 %v217
      %v396 = vunpack.c.h.b16 %v217
      %v397 = vunpack.c.l.b16 %v218
      %v398 = vunpack.c.l.b16 %v219
      %v399 = vunpack.c.h.b16 %v219
      %v400 = vunpack.c.l.b16 %v220
      %v401 = vunpack.c.l.b16 %v221
      %v402 = vunpack.c.h.b16 %v221
      %v403 = vunpack.c.l.b16 %v222
      %v404 = vunpack.c.l.b16 %v223
      %v405 = vunpack.c.h.b16 %v223
      %v406 = vunpack.c.l.b16 %v224
      %v407 = vunpack.c.l.b16 %v225
      %v408 = vunpack.c.h.b16 %v225
      %v409 = vunpack.c.l.b16 %v226
      %v410 = vunpack.c.l.b16 %v227
      %v411 = vunpack.c.h.b16 %v227
      %v412 = vunpack.c.l.b16 %v228
      %v413 = vunpack.c.l.b16 %v229
      %v414 = vunpack.c.h.b16 %v229
      %v415 = vunpack.c.l.b16 %v230
      %v416 = vunpack.c.l.b16 %v231
      %v417 = vunpack.c.h.b16 %v231
      %v418 = vunpack.c.l.b16 %v232
      %v419 = vunpack.c.l.b16 %v233
      %v420 = vunpack.c.h.b16 %v233
      %v421 = vunpack.c.l.b16 %v234
      %v422 = vunpack.c.l.b16 %v235
      %v423 = vunpack.c.h.b16 %v235
      %v424 = vunpack.c.l.b16 %v236
      %v425 = vunpack.c.l.b16 %v237
      %v426 = vunpack.c.h.b16 %v237
      %v427 = vunpack.c.l.b16 %v238
      %v428 = vunpack.c.l.b16 %v239
      %v429 = vunpack.c.h.b16 %v239
      %v430 = vunpack.c.l.b16 %v240
      %v431 = vunpack.c.l.b16 %v241
      %v432 = vunpack.c.h.b16 %v241
      %v433 = vunpack.c.l.b16 %v242
      %v434 = vunpack.c.l.b16 %v243
      %v435 = vunpack.c.h.b16 %v243
      %v436 = vunpack.c.l.b16 %v244
      %v437 = vunpack.c.l.b16 %v245
      %v438 = vunpack.c.h.b16 %v245
      %v439 = vunpack.c.l.b16 %v246
      %v440 = vunpack.c.l.b16 %v247
      %v441 = vunpack.c.h.b16 %v247
      %v442 = vunpack.c.l.b16 %v248
      %v443 = vunpack.c.l.b16 %v249
      %v444 = vunpack.c.h.b16 %v249
      %v445 = vunpack.c.l.b16 %v250
      %v446 = vunpack.c.l.b16 %v251
      %v447 = vunpack.c.h.b16 %v251
      %v448 = vunpack.c.l.b16 %v252
      %v449 = vpack.c.b16 %v356, %v353
      %v450 = vpack.c.b16 %v357, %v354
      %v451 = vpack.c.b16 %v358, %v355
      %v452 = vpack.c.b16 %v362, %v359
      %v453 = vpack.c.b16 %v363, %v360
      %v454 = vpack.c.b16 %v364, %v361
      %v455 = vpack.c.b16 %v368, %v365
      %v456 = vpack.c.b16 %v369, %v366
      %v457 = vpack.c.b16 %v370, %v367
      %v458 = vpack.c.b16 %v374, %v371
      %v459 = vpack.c.b16 %v375, %v372
      %v460 = vpack.c.b16 %v376, %v373
      %v461 = vpack.c.b16 %v380, %v377
      %v462 = vpack.c.b16 %v381, %v378
      %v463 = vpack.c.b16 %v382, %v379
      %v464 = vpack.c.b16 %v386, %v383
      %v465 = vpack.c.b16 %v387, %v384
      %v466 = vpack.c.b16 %v388, %v385
      %v467 = vpack.c.b16 %v392, %v389
      %v468 = vpack.c.b16 %v393, %v390
      %v469 = vpack.c.b16 %v394, %v391
      %v470 = vpack.c.b16 %v398, %v395
      %v471 = vpack.c.b16 %v399, %v396
      %v472 = vpack.c.b16 %v400, %v397
      %v473 = vpack.c.b16 %v404, %v401
      %v474 = vpack.c.b16 %v405, %v402
      %v475 = vpack.c.b16 %v406, %v403
      %v476 = vpack.c.b16 %v410, %v407
      %v477 = vpack.c.b16 %v411, %v408
      %v478 = vpack.c.b16 %v412, %v409
      %v479 = vpack.c.b16 %v416, %v413
      %v480 = vpack.c.b16 %v417, %v414
      %v481 = vpack.c.b16 %v418, %v415
      %v482 = vpack.c.b16 %v422, %v419
      %v483 = vpack.c.b16 %v423, %v420
      %v484 = vpack.c.b16 %v424, %v421
      %v485 = vpack.c.b16 %v428, %v425
      %v486 = vpack.c.b16 %v429, %v426
      %v487 = vpack.c.b16 %v430, %v427
      %v488 = vpack.c.b16 %v434, %v431
      %v489 = vpack.c.b16 %v435, %v432
      %v490 = vpack.c.b16 %v436, %v433
      %v491 = vpack.c.b16 %v440, %v437
      %v492 = vpack.c.b16 %v441, %v438
      %v493 = vpack.c.b16 %v442, %v439
      %v494 = vpack.c.b16 %v446, %v443
      %v495 = vpack.c.b16 %v447, %v444
      %v496 = vpack.c.b16 %v448, %v445
      %v565 = vunpack.c.l.b16 %v253
      %v566 = vunpack.c.l.b16 %v254
      %v567 = vunpack.c.l.b16 %v255
      %v568 = vunpack.c.l.b16 %v256
      %v569 = vunpack.c.l.b16 %v257
      %v570 = vunpack.c.l.b16 %v258
      %v571 = vunpack.c.l.b16 %v259
      %v572 = vunpack.c.l.b16 %v260
      %v573 = vunpack.c.l.b16 %v261
      %v574 = vunpack.c.l.b16 %v262
      %v575 = vunpack.c.l.b16 %v263
      %v576 = vunpack.c.l.b16 %v264
      %v577 = vunpack.c.l.b16 %v265
      %v578 = vunpack.c.l.b16 %v266
      %v579 = vunpack.c.l.b16 %v267
      %v580 = vunpack.c.l.b16 %v268
      %v581 = vunpack.c.l.b16 %v269
      %v582 = vunpack.c.l.b16 %v270
      %v583 = vunpack.c.l.b16 %v271
      %v584 = vunpack.c.l.b16 %v272
      %v585 = vunpack.c.l.b16 %v273
      %v586 = vunpack.c.l.b16 %v274
      %v587 = vunpack.c.l.b16 %v275
      %v588 = vunpack.c.l.b16 %v276
      %v589 = vunpack.c.l.b16 %v277
      %v590 = vunpack.c.l.b16 %v278
      %v591 = vunpack.c.l.b16 %v279
      %v592 = vunpack.c.l.b16 %v280
      %v593 = vunpack.c.l.b16 %v281
      %v594 = vunpack.c.l.b16 %v282
      %v595 = vunpack.c.l.b16 %v283
      %v596 = vunpack.c.l.b16 %v284
      %v597 = vunpack.c.l.b16 %v285
      %v598 = vunpack.c.l.b16 %v286
      %v599 = vunpack.c.l.b16 %v287
      %v600 = vunpack.c.l.b16 %v288
      %v601 = vpack.c.b16 %v566, %v565
      %v602 = vpack.c.b16 %v568, %v567
      %v603 = vpack.c.b16 %v570, %v569
      %v604 = vpack.c.b16 %v572, %v571
      %v605 = vpack.c.b16 %v574, %v573
      %v606 = vpack.c.b16 %v576, %v575
      %v607 = vpack.c.b16 %v578, %v577
      %v608 = vpack.c.b16 %v580, %v579
      %v609 = vpack.c.b16 %v582, %v581
      %v610 = vpack.c.b16 %v584, %v583
      %v611 = vpack.c.b16 %v586, %v585
      %v612 = vpack.c.b16 %v588, %v587
      %v613 = vpack.c.b16 %v590, %v589
      %v614 = vpack.c.b16 %v592, %v591
      %v615 = vpack.c.b16 %v594, %v593
      %v616 = vpack.c.b16 %v596, %v595
      %v617 = vpack.c.b16 %v598, %v597
      %v618 = vpack.c.b16 %v600, %v599
      %vm637 = vcmask 261120
      %v639 = vsel %vm637, %v451, 0
      %v642 = vsel %vm637, %v454, 0
      %v645 = vsel %vm637, %v457, 0
      %v648 = vsel %vm637, %v460, 0
      %v651 = vsel %vm637, %v463, 0
      %v654 = vsel %vm637, %v466, 0
      %v657 = vsel %vm637, %v469, 0
      %v660 = vsel %vm637, %v472, 0
      %v663 = vsel %vm637, %v475, 0
      %v666 = vsel %vm637, %v478, 0
      %v669 = vsel %vm637, %v481, 0
      %v672 = vsel %vm637, %v484, 0
      %v675 = vsel %vm637, %v487, 0
      %v678 = vsel %vm637, %v490, 0
      %v681 = vsel %vm637, %v493, 0
      %v684 = vsel %vm637, %v496, 0
      %686 = vmatprep.subr.bf16.mxu0 0
      %687 = vmatpush1.bf16.msra.mxu0 %v608
      %688 = vmatprep.subr.bf16.mxu0 0
      %689 = vmatpush1.bf16.msra.mxu0 %v607
      %690 = vmatprep.subr.bf16.mxu0 0
      %691 = vmatpush1.bf16.msra.mxu0 %v606
      %692 = vmatprep.subr.bf16.mxu0 0
      %693 = vmatpush1.bf16.msra.mxu0 %v605
      %694 = vmatprep.subr.bf16.mxu0 0
      %695 = vmatpush1.bf16.msra.mxu0 %v604
      %696 = vmatprep.subr.bf16.mxu0 0
      %697 = vmatpush1.bf16.msra.mxu0 %v603
      %698 = vmatprep.subr.bf16.mxu0 0
      %699 = vmatpush1.bf16.msra.mxu0 %v602
      %700 = vmatprep.subr.bf16.mxu0 0
      %701 = vmatpush1.bf16.msra.mxu0 %v601
      %702 = vmatprep.subr.bf16.mxu0 0
      %703 = vmatpush2.bf16.msra.mxu0 %v616
      %704 = vmatprep.subr.bf16.mxu0 0
      %705 = vmatpush2.bf16.msra.mxu0 %v615
      %706 = vmatprep.subr.bf16.mxu0 0
      %707 = vmatpush2.bf16.msra.mxu0 %v614
      %708 = vmatprep.subr.bf16.mxu0 0
      %709 = vmatpush2.bf16.msra.mxu0 %v613
      %710 = vmatprep.subr.bf16.mxu0 0
      %711 = vmatpush2.bf16.msra.mxu0 %v612
      %712 = vmatprep.subr.bf16.mxu0 0
      %713 = vmatpush2.bf16.msra.mxu0 %v611
      %714 = vmatprep.subr.bf16.mxu0 0
      %715 = vmatpush2.bf16.msra.mxu0 %v610
      %716 = vmatprep.subr.bf16.mxu0 0
      %717 = vmatpush2.bf16.msra.mxu0 %v609
      %718 = vmatprep.mubr.bf16.mxu0 %v450
      %719 = vmatmul.mubr.bf16.gmra.mxu0 %v449
      %v720 = vpop.f32.mrf.mxu0
      %v721 = vadd.f32 0.0, %v720
      %v722 = vpop.f32.mrf.mxu0
      %v723 = vpop.f32.mrf.mxu0
      %v724 = vadd.f32 0.0, %v723
      %v725 = vpop.f32.mrf.mxu0
      %726 = vmatprep.mubr.bf16.mxu0 %v453
      %727 = vmatmul.mubr.bf16.gmra.mxu0 %v452
      %v728 = vpop.f32.mrf.mxu0
      %v729 = vadd.f32 0.0, %v728
      %v730 = vpop.f32.mrf.mxu0
      %v731 = vpop.f32.mrf.mxu0
      %v732 = vadd.f32 0.0, %v731
      %v733 = vpop.f32.mrf.mxu0
      %734 = vmatprep.mubr.bf16.mxu0 %v456
      %735 = vmatmul.mubr.bf16.gmra.mxu0 %v455
      %v736 = vpop.f32.mrf.mxu0
      %v737 = vadd.f32 0.0, %v736
      %v738 = vpop.f32.mrf.mxu0
      %v739 = vpop.f32.mrf.mxu0
      %v740 = vadd.f32 0.0, %v739
      %v741 = vpop.f32.mrf.mxu0
      %742 = vmatprep.mubr.bf16.mxu0 %v459
      %743 = vmatmul.mubr.bf16.gmra.mxu0 %v458
      %v744 = vpop.f32.mrf.mxu0
      %v745 = vadd.f32 0.0, %v744
      %v746 = vpop.f32.mrf.mxu0
      %v747 = vpop.f32.mrf.mxu0
      %v748 = vadd.f32 0.0, %v747
      %v749 = vpop.f32.mrf.mxu0
      %750 = vmatprep.mubr.bf16.mxu0 %v462
      %751 = vmatmul.mubr.bf16.gmra.mxu0 %v461
      %v752 = vpop.f32.mrf.mxu0
      %v753 = vadd.f32 0.0, %v752
      %v754 = vpop.f32.mrf.mxu0
      %v755 = vpop.f32.mrf.mxu0
      %v756 = vadd.f32 0.0, %v755
      %v757 = vpop.f32.mrf.mxu0
      %758 = vmatprep.mubr.bf16.mxu0 %v465
      %759 = vmatmul.mubr.bf16.gmra.mxu0 %v464
      %v760 = vpop.f32.mrf.mxu0
      %v761 = vadd.f32 0.0, %v760
      %v762 = vpop.f32.mrf.mxu0
      %v763 = vpop.f32.mrf.mxu0
      %v764 = vadd.f32 0.0, %v763
      %v765 = vpop.f32.mrf.mxu0
      %766 = vmatprep.mubr.bf16.mxu0 %v468
      %767 = vmatmul.mubr.bf16.gmra.mxu0 %v467
      %v768 = vpop.f32.mrf.mxu0
      %v769 = vadd.f32 0.0, %v768
      %v770 = vpop.f32.mrf.mxu0
      %v771 = vpop.f32.mrf.mxu0
      %v772 = vadd.f32 0.0, %v771
      %v773 = vpop.f32.mrf.mxu0
      %774 = vmatprep.mubr.bf16.mxu0 %v471
      %775 = vmatmul.mubr.bf16.gmra.mxu0 %v470
      %v776 = vpop.f32.mrf.mxu0
      %v777 = vadd.f32 0.0, %v776
      %v778 = vpop.f32.mrf.mxu0
      %v779 = vpop.f32.mrf.mxu0
      %v780 = vadd.f32 0.0, %v779
      %v781 = vpop.f32.mrf.mxu0
      %782 = vmatprep.mubr.bf16.mxu0 %v474
      %783 = vmatmul.mubr.bf16.gmra.mxu0 %v473
      %v784 = vpop.f32.mrf.mxu0
      %v785 = vadd.f32 0.0, %v784
      %v786 = vpop.f32.mrf.mxu0
      %v787 = vpop.f32.mrf.mxu0
      %v788 = vadd.f32 0.0, %v787
      %v789 = vpop.f32.mrf.mxu0
      %790 = vmatprep.mubr.bf16.mxu0 %v477
      %791 = vmatmul.mubr.bf16.gmra.mxu0 %v476
      %v792 = vpop.f32.mrf.mxu0
      %v793 = vadd.f32 0.0, %v792
      %v794 = vpop.f32.mrf.mxu0
      %v795 = vpop.f32.mrf.mxu0
      %v796 = vadd.f32 0.0, %v795
      %v797 = vpop.f32.mrf.mxu0
      %798 = vmatprep.mubr.bf16.mxu0 %v480
      %799 = vmatmul.mubr.bf16.gmra.mxu0 %v479
      %v800 = vpop.f32.mrf.mxu0
      %v801 = vadd.f32 0.0, %v800
      %v802 = vpop.f32.mrf.mxu0
      %v803 = vpop.f32.mrf.mxu0
      %v804 = vadd.f32 0.0, %v803
      %v805 = vpop.f32.mrf.mxu0
      %806 = vmatprep.mubr.bf16.mxu0 %v483
      %807 = vmatmul.mubr.bf16.gmra.mxu0 %v482
      %v808 = vpop.f32.mrf.mxu0
      %v809 = vadd.f32 0.0, %v808
      %v810 = vpop.f32.mrf.mxu0
      %v811 = vpop.f32.mrf.mxu0
      %v812 = vadd.f32 0.0, %v811
      %v813 = vpop.f32.mrf.mxu0
      %814 = vmatprep.mubr.bf16.mxu0 %v486
      %815 = vmatmul.mubr.bf16.gmra.mxu0 %v485
      %v816 = vpop.f32.mrf.mxu0
      %v817 = vadd.f32 0.0, %v816
      %v818 = vpop.f32.mrf.mxu0
      %v819 = vpop.f32.mrf.mxu0
      %v820 = vadd.f32 0.0, %v819
      %v821 = vpop.f32.mrf.mxu0
      %822 = vmatprep.mubr.bf16.mxu0 %v489
      %823 = vmatmul.mubr.bf16.gmra.mxu0 %v488
      %v824 = vpop.f32.mrf.mxu0
      %v825 = vadd.f32 0.0, %v824
      %v826 = vpop.f32.mrf.mxu0
      %v827 = vpop.f32.mrf.mxu0
      %v828 = vadd.f32 0.0, %v827
      %v829 = vpop.f32.mrf.mxu0
      %830 = vmatprep.mubr.bf16.mxu0 %v492
      %831 = vmatmul.mubr.bf16.gmra.mxu0 %v491
      %v832 = vpop.f32.mrf.mxu0
      %v833 = vadd.f32 0.0, %v832
      %v834 = vpop.f32.mrf.mxu0
      %v835 = vpop.f32.mrf.mxu0
      %v836 = vadd.f32 0.0, %v835
      %v837 = vpop.f32.mrf.mxu0
      %838 = vmatprep.mubr.bf16.mxu0 %v495
      %839 = vmatmul.mubr.bf16.gmra.mxu0 %v494
      %v840 = vpop.f32.mrf.mxu0
      %v841 = vadd.f32 0.0, %v840
      %v842 = vpop.f32.mrf.mxu0
      %v843 = vpop.f32.mrf.mxu0
      %v844 = vadd.f32 0.0, %v843
      %v845 = vpop.f32.mrf.mxu0
      %846 = vdwg.mxu0
      %847 = vmatprep.subr.bf16.mxu0 0
      %848 = vmatpush1.bf16.msra.mxu0 0
      %849 = vmatprep.subr.bf16.mxu0 0
      %850 = vmatpush1.bf16.msra.mxu0 0
      %851 = vmatprep.subr.bf16.mxu0 0
      %852 = vmatpush1.bf16.msra.mxu0 0
      %853 = vmatprep.subr.bf16.mxu0 0
      %854 = vmatpush1.bf16.msra.mxu0 0
      %855 = vmatprep.subr.bf16.mxu0 0
      %856 = vmatpush1.bf16.msra.mxu0 0
      %857 = vmatprep.subr.bf16.mxu0 0
      %858 = vmatpush1.bf16.msra.mxu0 0
      %859 = vmatprep.subr.bf16.mxu0 0
      %860 = vmatpush1.bf16.msra.mxu0 %v618
      %861 = vmatprep.subr.bf16.mxu0 0
      %862 = vmatpush1.bf16.msra.mxu0 %v617
      %863 = vmatprep.subr.bf16.mxu0 0
      %864 = vmatpush2.bf16.msra.mxu0 0
      %865 = vmatprep.subr.bf16.mxu0 0
      %866 = vmatpush2.bf16.msra.mxu0 0
      %867 = vmatprep.subr.bf16.mxu0 0
      %868 = vmatpush2.bf16.msra.mxu0 0
      %869 = vmatprep.subr.bf16.mxu0 0
      %870 = vmatpush2.bf16.msra.mxu0 0
      %871 = vmatprep.subr.bf16.mxu0 0
      %872 = vmatpush2.bf16.msra.mxu0 0
      %873 = vmatprep.subr.bf16.mxu0 0
      %874 = vmatpush2.bf16.msra.mxu0 0
      %875 = vmatprep.subr.bf16.mxu0 0
      %876 = vmatpush2.bf16.msra.mxu0 0
      %877 = vmatprep.subr.bf16.mxu0 0
      %878 = vmatpush2.bf16.msra.mxu0 0
      %879 = vmatprep.mubr.bf16.mxu0 0
      %880 = vmatmul.mubr.bf16.gmra.mxu0 %v639
      %v881 = vpop.f32.mrf.mxu0
      %v882 = vadd.f32 %v721, %v881
      %v883 = vpop.f32.mrf.mxu0
      %v884 = vpop.f32.mrf.mxu0
      %v885 = vadd.f32 %v724, %v884
      %v886 = vpop.f32.mrf.mxu0
      %887 = vmatprep.mubr.bf16.mxu0 0
      %888 = vmatmul.mubr.bf16.gmra.mxu0 %v642
      %v889 = vpop.f32.mrf.mxu0
      %v890 = vadd.f32 %v729, %v889
      %v891 = vpop.f32.mrf.mxu0
      %v892 = vpop.f32.mrf.mxu0
      %v893 = vadd.f32 %v732, %v892
      %v894 = vpop.f32.mrf.mxu0
      %895 = vmatprep.mubr.bf16.mxu0 0
      %896 = vmatmul.mubr.bf16.gmra.mxu0 %v645
      %v897 = vpop.f32.mrf.mxu0
      %v898 = vadd.f32 %v737, %v897
      %v899 = vpop.f32.mrf.mxu0
      %v900 = vpop.f32.mrf.mxu0
      %v901 = vadd.f32 %v740, %v900
      %v902 = vpop.f32.mrf.mxu0
      %903 = vmatprep.mubr.bf16.mxu0 0
      %904 = vmatmul.mubr.bf16.gmra.mxu0 %v648
      %v905 = vpop.f32.mrf.mxu0
      %v906 = vadd.f32 %v745, %v905
      %v907 = vpop.f32.mrf.mxu0
      %v908 = vpop.f32.mrf.mxu0
      %v909 = vadd.f32 %v748, %v908
      %v910 = vpop.f32.mrf.mxu0
      %911 = vmatprep.mubr.bf16.mxu0 0
      %912 = vmatmul.mubr.bf16.gmra.mxu0 %v651
      %v913 = vpop.f32.mrf.mxu0
      %v914 = vadd.f32 %v753, %v913
      %v915 = vpop.f32.mrf.mxu0
      %v916 = vpop.f32.mrf.mxu0
      %v917 = vadd.f32 %v756, %v916
      %v918 = vpop.f32.mrf.mxu0
      %919 = vmatprep.mubr.bf16.mxu0 0
      %920 = vmatmul.mubr.bf16.gmra.mxu0 %v654
      %v921 = vpop.f32.mrf.mxu0
      %v922 = vadd.f32 %v761, %v921
      %v923 = vpop.f32.mrf.mxu0
      %v924 = vpop.f32.mrf.mxu0
      %v925 = vadd.f32 %v764, %v924
      %v926 = vpop.f32.mrf.mxu0
      %927 = vmatprep.mubr.bf16.mxu0 0
      %928 = vmatmul.mubr.bf16.gmra.mxu0 %v657
      %v929 = vpop.f32.mrf.mxu0
      %v930 = vadd.f32 %v769, %v929
      %v931 = vpop.f32.mrf.mxu0
      %v932 = vpop.f32.mrf.mxu0
      %v933 = vadd.f32 %v772, %v932
      %v934 = vpop.f32.mrf.mxu0
      %935 = vmatprep.mubr.bf16.mxu0 0
      %936 = vmatmul.mubr.bf16.gmra.mxu0 %v660
      %v937 = vpop.f32.mrf.mxu0
      %v938 = vadd.f32 %v777, %v937
      %v939 = vpop.f32.mrf.mxu0
      %v940 = vpop.f32.mrf.mxu0
      %v941 = vadd.f32 %v780, %v940
      %v942 = vpop.f32.mrf.mxu0
      %943 = vmatprep.mubr.bf16.mxu0 0
      %944 = vmatmul.mubr.bf16.gmra.mxu0 %v663
      %v945 = vpop.f32.mrf.mxu0
      %v946 = vadd.f32 %v785, %v945
      %v947 = vpop.f32.mrf.mxu0
      %v948 = vpop.f32.mrf.mxu0
      %v949 = vadd.f32 %v788, %v948
      %v950 = vpop.f32.mrf.mxu0
      %951 = vmatprep.mubr.bf16.mxu0 0
      %952 = vmatmul.mubr.bf16.gmra.mxu0 %v666
      %v953 = vpop.f32.mrf.mxu0
      %v954 = vadd.f32 %v793, %v953
      %v955 = vpop.f32.mrf.mxu0
      %v956 = vpop.f32.mrf.mxu0
      %v957 = vadd.f32 %v796, %v956
      %v958 = vpop.f32.mrf.mxu0
      %959 = vmatprep.mubr.bf16.mxu0 0
      %960 = vmatmul.mubr.bf16.gmra.mxu0 %v669
      %v961 = vpop.f32.mrf.mxu0
      %v962 = vadd.f32 %v801, %v961
      %v963 = vpop.f32.mrf.mxu0
      %v964 = vpop.f32.mrf.mxu0
      %v965 = vadd.f32 %v804, %v964
      %v966 = vpop.f32.mrf.mxu0
      %967 = vmatprep.mubr.bf16.mxu0 0
      %968 = vmatmul.mubr.bf16.gmra.mxu0 %v672
      %v969 = vpop.f32.mrf.mxu0
      %v970 = vadd.f32 %v809, %v969
      %v971 = vpop.f32.mrf.mxu0
      %v972 = vpop.f32.mrf.mxu0
      %v973 = vadd.f32 %v812, %v972
      %v974 = vpop.f32.mrf.mxu0
      %975 = vmatprep.mubr.bf16.mxu0 0
      %976 = vmatmul.mubr.bf16.gmra.mxu0 %v675
      %v977 = vpop.f32.mrf.mxu0
      %v978 = vadd.f32 %v817, %v977
      %v979 = vpop.f32.mrf.mxu0
      %v980 = vpop.f32.mrf.mxu0
      %v981 = vadd.f32 %v820, %v980
      %v982 = vpop.f32.mrf.mxu0
      %983 = vmatprep.mubr.bf16.mxu0 0
      %984 = vmatmul.mubr.bf16.gmra.mxu0 %v678
      %v985 = vpop.f32.mrf.mxu0
      %v986 = vadd.f32 %v825, %v985
      %v987 = vpop.f32.mrf.mxu0
      %v988 = vpop.f32.mrf.mxu0
      %v989 = vadd.f32 %v828, %v988
      %v990 = vpop.f32.mrf.mxu0
      %991 = vmatprep.mubr.bf16.mxu0 0
      %992 = vmatmul.mubr.bf16.gmra.mxu0 %v681
      %v993 = vpop.f32.mrf.mxu0
      %v994 = vadd.f32 %v833, %v993
      %v995 = vpop.f32.mrf.mxu0
      %v996 = vpop.f32.mrf.mxu0
      %v997 = vadd.f32 %v836, %v996
      %v998 = vpop.f32.mrf.mxu0
      %999 = vmatprep.mubr.bf16.mxu0 0
      %1000 = vmatmul.mubr.bf16.gmra.mxu0 %v684
      %v1001 = vpop.f32.mrf.mxu0
      %v1002 = vadd.f32 %v841, %v1001
      %v1003 = vpop.f32.mrf.mxu0
      %v1004 = vpop.f32.mrf.mxu0
      %v1005 = vadd.f32 %v844, %v1004
      %v1006 = vpop.f32.mrf.mxu0
      %1007 = vdwg.mxu0
      %1008 = vst.msk [vmem:[%s182] sm:$0xff] %vm637, %v882
      %1009 = vst.msk [vmem:[%s182 + $0x8] sm:$0xff] %vm637, %v885
      %1010 = vst.msk [vmem:[%s182 + $0x10] sm:$0xff] %vm637, %v890
      %1011 = vst.msk [vmem:[%s182 + $0x18] sm:$0xff] %vm637, %v893
      %1012 = vst.msk [vmem:[%s182 + $0x20] sm:$0xff] %vm637, %v898
      %1013 = vst.msk [vmem:[%s182 + $0x28] sm:$0xff] %vm637, %v901
      %1014 = vst.msk [vmem:[%s182 + $0x30] sm:$0xff] %vm637, %v906
      %1015 = vst.msk [vmem:[%s182 + $0x38] sm:$0xff] %vm637, %v909
      %1016 = vst.msk [vmem:[%s182 + $0x40] sm:$0xff] %vm637, %v914
      %1017 = vst.msk [vmem:[%s182 + $0x48] sm:$0xff] %vm637, %v917
      %1018 = vst.msk [vmem:[%s182 + $0x50] sm:$0xff] %vm637, %v922
      %1019 = vst.msk [vmem:[%s182 + $0x58] sm:$0xff] %vm637, %v925
      %1020 = vst.msk [vmem:[%s182 + $0x60] sm:$0xff] %vm637, %v930
      %1021 = vst.msk [vmem:[%s182 + $0x68] sm:$0xff] %vm637, %v933
      %1022 = vst.msk [vmem:[%s182 + $0x70] sm:$0xff] %vm637, %v938
      %1023 = vst.msk [vmem:[%s182 + $0x78] sm:$0xff] %vm637, %v941
      %1024 = vst.msk [vmem:[%s182 + $0x80] sm:$0xff] %vm637, %v946
      %1025 = vst.msk [vmem:[%s182 + $0x88] sm:$0xff] %vm637, %v949
      %1026 = vst.msk [vmem:[%s182 + $0x90] sm:$0xff] %vm637, %v954
      %1027 = vst.msk [vmem:[%s182 + $0x98] sm:$0xff] %vm637, %v957
      %1028 = vst.msk [vmem:[%s182 + $0xa0] sm:$0xff] %vm637, %v962
      %1029 = vst.msk [vmem:[%s182 + $0xa8] sm:$0xff] %vm637, %v965
      %1030 = vst.msk [vmem:[%s182 + $0xb0] sm:$0xff] %vm637, %v970
      %1031 = vst.msk [vmem:[%s182 + $0xb8] sm:$0xff] %vm637, %v973
      %1032 = vst.msk [vmem:[%s182 + $0xc0] sm:$0xff] %vm637, %v978
      %1033 = vst.msk [vmem:[%s182 + $0xc8] sm:$0xff] %vm637, %v981
      %1034 = vst.msk [vmem:[%s182 + $0xd0] sm:$0xff] %vm637, %v986
      %1035 = vst.msk [vmem:[%s182 + $0xd8] sm:$0xff] %vm637, %v989
      %1036 = vst.msk [vmem:[%s182 + $0xe0] sm:$0xff] %vm637, %v994
      %1037 = vst.msk [vmem:[%s182 + $0xe8] sm:$0xff] %vm637, %v997
      %1038 = vst.msk [vmem:[%s182 + $0xf0] sm:$0xff] %vm637, %v1002
      %1039 = vst.msk [vmem:[%s182 + $0xf8] sm:$0xff] %vm637, %v1005
      %v1040 = vsel %vm637, %v882, 0.0
      %v1041 = vsel %vm637, %v885, 0.0
      %v1042 = vadd.f32 %v1040, %v1041
      %v1043 = vsel %vm637, %v890, 0.0
      %v1044 = vadd.f32 %v1042, %v1043
      %v1045 = vsel %vm637, %v893, 0.0
      %v1046 = vadd.f32 %v1044, %v1045
      %v1047 = vsel %vm637, %v898, 0.0
      %v1048 = vadd.f32 %v1046, %v1047
      %v1049 = vsel %vm637, %v901, 0.0
      %v1050 = vadd.f32 %v1048, %v1049
      %v1051 = vsel %vm637, %v906, 0.0
      %v1052 = vadd.f32 %v1050, %v1051
      %v1053 = vsel %vm637, %v909, 0.0
      %v1054 = vadd.f32 %v1052, %v1053
      %v1055 = vsel %vm637, %v914, 0.0
      %v1056 = vadd.f32 %v1054, %v1055
      %v1057 = vsel %vm637, %v917, 0.0
      %v1058 = vadd.f32 %v1056, %v1057
      %v1059 = vsel %vm637, %v922, 0.0
      %v1060 = vadd.f32 %v1058, %v1059
      %v1061 = vsel %vm637, %v925, 0.0
      %v1062 = vadd.f32 %v1060, %v1061
      %v1063 = vsel %vm637, %v930, 0.0
      %v1064 = vadd.f32 %v1062, %v1063
      %v1065 = vsel %vm637, %v933, 0.0
      %v1066 = vadd.f32 %v1064, %v1065
      %v1067 = vsel %vm637, %v938, 0.0
      %v1068 = vadd.f32 %v1066, %v1067
      %v1069 = vsel %vm637, %v941, 0.0
      %v1070 = vadd.f32 %v1068, %v1069
      %v1071 = vsel %vm637, %v946, 0.0
      %v1072 = vadd.f32 %v1070, %v1071
      %v1073 = vsel %vm637, %v949, 0.0
      %v1074 = vadd.f32 %v1072, %v1073
      %v1075 = vsel %vm637, %v954, 0.0
      %v1076 = vadd.f32 %v1074, %v1075
      %v1077 = vsel %vm637, %v957, 0.0
      %v1078 = vadd.f32 %v1076, %v1077
      %v1079 = vsel %vm637, %v962, 0.0
      %v1080 = vadd.f32 %v1078, %v1079
      %v1081 = vsel %vm637, %v965, 0.0
      %v1082 = vadd.f32 %v1080, %v1081
      %v1083 = vsel %vm637, %v970, 0.0
      %v1084 = vadd.f32 %v1082, %v1083
      %v1085 = vsel %vm637, %v973, 0.0
      %v1086 = vadd.f32 %v1084, %v1085
      %v1087 = vsel %vm637, %v978, 0.0
      %v1088 = vadd.f32 %v1086, %v1087
      %v1089 = vsel %vm637, %v981, 0.0
      %v1090 = vadd.f32 %v1088, %v1089
      %v1091 = vsel %vm637, %v986, 0.0
      %v1092 = vadd.f32 %v1090, %v1091
      %v1093 = vsel %vm637, %v989, 0.0
      %v1094 = vadd.f32 %v1092, %v1093
      %v1095 = vsel %vm637, %v994, 0.0
      %v1096 = vadd.f32 %v1094, %v1095
      %v1097 = vsel %vm637, %v997, 0.0
      %v1098 = vadd.f32 %v1096, %v1097
      %v1099 = vsel %vm637, %v1002, 0.0
      %v1100 = vadd.f32 %v1098, %v1099
      %v1101 = vsel %vm637, %v1005, 0.0
      %v1102 = vadd.f32 %v1100, %v1101
      %v1103 = vrot.slane %v1102, 4
      %v1104 = vadd.f32 %v1102, %v1103
      %v1105 = vrot.slane %v1104, 2
      %v1106 = vadd.f32 %v1104, %v1105
      %v1107 = vrot.slane %v1106, 1
      %v1108 = vadd.f32 %v1106, %v1107
      %vm1109 = vcmask 253952
      %1110 = vst.msk [vmem:[%s187] sm:$0x1] %vm1109, %v1108
      %v1111 = vmul.f32 %v882, %v882
      %v1112 = vmul.f32 %v885, %v885
      %v1113 = vmul.f32 %v890, %v890
      %v1114 = vmul.f32 %v893, %v893
      %v1115 = vmul.f32 %v898, %v898
      %v1116 = vmul.f32 %v901, %v901
      %v1117 = vmul.f32 %v906, %v906
      %v1118 = vmul.f32 %v909, %v909
      %v1119 = vmul.f32 %v914, %v914
      %v1120 = vmul.f32 %v917, %v917
      %v1121 = vmul.f32 %v922, %v922
      %v1122 = vmul.f32 %v925, %v925
      %v1123 = vmul.f32 %v930, %v930
      %v1124 = vmul.f32 %v933, %v933
      %v1125 = vmul.f32 %v938, %v938
      %v1126 = vmul.f32 %v941, %v941
      %v1127 = vmul.f32 %v946, %v946
      %v1128 = vmul.f32 %v949, %v949
      %v1129 = vmul.f32 %v954, %v954
      %v1130 = vmul.f32 %v957, %v957
      %v1131 = vmul.f32 %v962, %v962
      %v1132 = vmul.f32 %v965, %v965
      %v1133 = vmul.f32 %v970, %v970
      %v1134 = vmul.f32 %v973, %v973
      %v1135 = vmul.f32 %v978, %v978
      %v1136 = vmul.f32 %v981, %v981
      %v1137 = vmul.f32 %v986, %v986
      %v1138 = vmul.f32 %v989, %v989
      %v1139 = vmul.f32 %v994, %v994
      %v1140 = vmul.f32 %v997, %v997
      %v1141 = vmul.f32 %v1002, %v1002
      %v1142 = vmul.f32 %v1005, %v1005
      %v1143 = vsel %vm637, %v1111, 0.0
      %v1144 = vsel %vm637, %v1112, 0.0
      %v1145 = vadd.f32 %v1143, %v1144
      %v1146 = vsel %vm637, %v1113, 0.0
      %v1147 = vadd.f32 %v1145, %v1146
      %v1148 = vsel %vm637, %v1114, 0.0
      %v1149 = vadd.f32 %v1147, %v1148
      %v1150 = vsel %vm637, %v1115, 0.0
      %v1151 = vadd.f32 %v1149, %v1150
      %v1152 = vsel %vm637, %v1116, 0.0
      %v1153 = vadd.f32 %v1151, %v1152
      %v1154 = vsel %vm637, %v1117, 0.0
      %v1155 = vadd.f32 %v1153, %v1154
      %v1156 = vsel %vm637, %v1118, 0.0
      %v1157 = vadd.f32 %v1155, %v1156
      %v1158 = vsel %vm637, %v1119, 0.0
      %v1159 = vadd.f32 %v1157, %v1158
      %v1160 = vsel %vm637, %v1120, 0.0
      %v1161 = vadd.f32 %v1159, %v1160
      %v1162 = vsel %vm637, %v1121, 0.0
      %v1163 = vadd.f32 %v1161, %v1162
      %v1164 = vsel %vm637, %v1122, 0.0
      %v1165 = vadd.f32 %v1163, %v1164
      %v1166 = vsel %vm637, %v1123, 0.0
      %v1167 = vadd.f32 %v1165, %v1166
      %v1168 = vsel %vm637, %v1124, 0.0
      %v1169 = vadd.f32 %v1167, %v1168
      %v1170 = vsel %vm637, %v1125, 0.0
      %v1171 = vadd.f32 %v1169, %v1170
      %v1172 = vsel %vm637, %v1126, 0.0
      %v1173 = vadd.f32 %v1171, %v1172
      %v1174 = vsel %vm637, %v1127, 0.0
      %v1175 = vadd.f32 %v1173, %v1174
      %v1176 = vsel %vm637, %v1128, 0.0
      %v1177 = vadd.f32 %v1175, %v1176
      %v1178 = vsel %vm637, %v1129, 0.0
      %v1179 = vadd.f32 %v1177, %v1178
      %v1180 = vsel %vm637, %v1130, 0.0
      %v1181 = vadd.f32 %v1179, %v1180
      %v1182 = vsel %vm637, %v1131, 0.0
      %v1183 = vadd.f32 %v1181, %v1182
      %v1184 = vsel %vm637, %v1132, 0.0
      %v1185 = vadd.f32 %v1183, %v1184
      %v1186 = vsel %vm637, %v1133, 0.0
      %v1187 = vadd.f32 %v1185, %v1186
      %v1188 = vsel %vm637, %v1134, 0.0
      %v1189 = vadd.f32 %v1187, %v1188
      %v1190 = vsel %vm637, %v1135, 0.0
      %v1191 = vadd.f32 %v1189, %v1190
      %v1192 = vsel %vm637, %v1136, 0.0
      %v1193 = vadd.f32 %v1191, %v1192
      %v1194 = vsel %vm637, %v1137, 0.0
      %v1195 = vadd.f32 %v1193, %v1194
      %v1196 = vsel %vm637, %v1138, 0.0
      %v1197 = vadd.f32 %v1195, %v1196
      %v1198 = vsel %vm637, %v1139, 0.0
      %v1199 = vadd.f32 %v1197, %v1198
      %v1200 = vsel %vm637, %v1140, 0.0
      %v1201 = vadd.f32 %v1199, %v1200
      %v1202 = vsel %vm637, %v1141, 0.0
      %v1203 = vadd.f32 %v1201, %v1202
      %v1204 = vsel %vm637, %v1142, 0.0
      %v1205 = vadd.f32 %v1203, %v1204
      %v1206 = vrot.slane %v1205, 4
      %v1207 = vadd.f32 %v1205, %v1206
      %v1208 = vrot.slane %v1207, 2
      %v1209 = vadd.f32 %v1207, %v1208
      %v1210 = vrot.slane %v1209, 1
      %v1211 = vadd.f32 %v1209, %v1210
      %1212 = vst.msk [vmem:[%s187 + $0x1] sm:$0x1] %vm1109, %v1211
      %s1213 = smul.u32 32, %s15
      %p1214 = scmp.lt.s32.totalorder %s1213, 63
      %s1215 = scalar_select %p1214, %s1213, 63
      %s1216 = smul.addr %s1215, 8
      %s1217 = scalar_lea.vmem %s2, %s1216
      %p1218 = scmp.lt.s32.totalorder %s15, 1
      %s1219 = scalar_select %p1218, %s15, 1
      %s1220 = smul.addr %s1219, 2
      %s1221 = scalar_lea.vmem %s3, %s1220
      // Predicated region
      $region29: #{residual_block_forward.4} parent=27 // pred_check
        %p1222 = pneg %p80
      $region30: #{residual_block_forward.4} parent=27 // pred_check_branch
        %1224 = sbr.rel (%p1222) target = $region32
      $region31: #{residual_block_forward.4} parent=27 // pred_region
        %s1225 = smul.u32 32, %s15
      $region32: #{residual_block_forward.4} parent=27 // pred_fallthru
        _
      // Predicated region
      $region33: #{residual_block_forward.4} parent=27 // pred_check
        %p1226 = pneg %p106
      $region34: #{residual_block_forward.4} parent=27 // pred_check_branch
        %1228 = sbr.rel (%p1226) target = $region36
      $region35: #{residual_block_forward.4} parent=27 // pred_region
        _
      $region36: #{residual_block_forward.4} parent=27 // pred_fallthru
        _
    $region28: #{residual_block_forward.4} parent=5 // pred_fallthru
      _
    %p1229 = scmp.le.s32.totalorder 2, %s10
    // Predicated region
    $region37: #{residual_block_forward.4} parent=5 // pred_check
      %p1230 = pneg %p1229
    $region38: #{residual_block_forward.4} parent=5 // pred_check_branch
      %1232 = sbr.rel (%p1230) target = $region40
    $region39: #{residual_block_forward.4} parent=5 // pred_region
      %s1233 = ssub.s32 %s10, 2
      // Predicated region
      $region41: #{residual_block_forward.4} parent=39 // pred_check
        %p1234 = pneg %p86
      $region42: #{residual_block_forward.4} parent=39 // pred_check_branch
        %1236 = sbr.rel (%p1234) target = $region44
      $region43: #{residual_block_forward.4} parent=39 // pred_region
        %s1237 = smul.u32 32, %s16
        %p1238 = scmp.lt.s32.totalorder %s1237, 63
        %s1239 = scalar_select %p1238, %s1237, 63
        %s1240 = smul.addr %s1239, 8
        %s1241 = scalar_lea.vmem %s2, %s1240
      $region44: #{residual_block_forward.4} parent=39 // pred_fallthru
        _
      // Predicated region
      $region45: #{residual_block_forward.4} parent=39 // pred_check
        %p1242 = pneg %p112
      $region46: #{residual_block_forward.4} parent=39 // pred_check_branch
        %1244 = sbr.rel (%p1242) target = $region48
      $region47: #{residual_block_forward.4} parent=39 // pred_region
        %p1245 = scmp.lt.s32.totalorder %s16, 1
        %s1246 = scalar_select %p1245, %s16, 1
        %s1247 = smul.addr %s1246, 2
        %s1248 = scalar_lea.vmem %s3, %s1247
      $region48: #{residual_block_forward.4} parent=39 // pred_fallthru
        _
    $region40: #{residual_block_forward.4} parent=5 // pred_fallthru
      _
  $region6: #{residual_block_forward.4} parent=0 // loop_footer
    %s14 = sadd.s32 1, %s10
  $region7: #{residual_block_forward.4} parent=0 // loop_footer_branch
    %9 = sbr.rel target = $region3
  $region8: #{residual_block_forward.4} parent=0 // loop_exit
    _

// kernel: residual_block_forward.5
$region0: #{residual_block_forward.5}
  #allocation0 [shape = 'u32[]', space=smem, size = 0x4, offset = 0x4, fixed_abs, tag = 'smem constant byte address 0x4 - core index']
  #allocation1 [shape = 'u32[144,128]{1,0:T(1,128)}', space=vmem, size = 0x12000, scoped, tag = 'internal scratch']
  %s0 = inlined_call_operand.vmem [shape: f32[128,128], index: 0, kind: input, shape index: {}]
  %s1 = inlined_call_operand.vmem [shape: f32[1,128], index: 1, kind: input, shape index: {}]
  %s2 = inlined_call_operand.vmem [shape: f32[1,128], index: 2, kind: input, shape index: {}]
  %s3 = inlined_call_operand.vmem [shape: f32[128,128], index: 3, kind: output, shape index: {}]
  %s4 = sld [smem:[#allocation0]]
  $region45: #{residual_block_forward.5} parent=0
    _
  %s6 = ssub.s32 1, %s4
  %s7 = scalar_select 0, %s6, %s4
  loop: start=0, step=1, limit=4
  $region2: #{residual_block_forward.5} parent=0 // loop_pre_header
    _
  $region3: #{residual_block_forward.5} parent=0 // loop_header
    %s9 = sphi 0, %s13
    %p10 = scmp.ge.s32.totalorder %s9, 4
    %s19 = sphi 0, %s21
    %s22 = sphi 0, %s19
    %s23 = sphi 0, %s22
    %s39 = sphi 0, %s23
    %s43 = sphi 0, %s43
    %s45 = sphi 0, %s43
    %s46 = sphi 0, %s45
    %s60 = sphi 0, %s46
    %s64 = sphi 0, %s64
    %s66 = sphi 0, %s64
    %s67 = sphi 0, %s66
    %s81 = sphi 0, %s67
    %s87 = sphi 0, %s89
    %s90 = sphi 0, %s87
    %s91 = sphi 0, %s90
    %s107 = sphi 0, %s91
  $region4: #{residual_block_forward.5} parent=0 // loop_header_branch
    %12 = sbr.rel (%p10) target = $region8
  $region5: #{residual_block_forward.5} parent=0 // loop_body
    %s14 = ssub.s32 %s9, 1
    %s15 = ssub.s32 %s9, 2
    %s16 = sadd.s32 %s9, 1
    %s17 = ssub.s32 %s9, %s16
    %p18 = scmp.eq.s32.totalorder %s17, 0
    %s20 = sadd.s32 %s19, 1
    %s21 = scalar_select %p18, %s19, %s20
    %p24 = pneg %p18
    %p25 = scmp.eq.s32.totalorder %s9, 1
    %p26 = por %p24, %p25
    %p27 = scmp.ne.s32.totalorder %s19, %s22
    %p28 = scmp.eq.s32.totalorder %s9, 0
    %p29 = por %p27, %p28
    %p30 = scmp.ne.s32.totalorder %s19, %s22
    %p31 = scmp.eq.s32.totalorder %s14, 1
    %p32 = por %p30, %p31
    %p33 = scmp.ne.s32.totalorder %s22, %s23
    %p34 = scmp.eq.s32.totalorder %s14, 0
    %p35 = por %p33, %p34
    %p36 = scmp.ne.s32.totalorder %s22, %s23
    %p37 = scmp.eq.s32.totalorder %s15, 1
    %p38 = por %p36, %p37
    %p40 = scmp.ne.s32.totalorder %s23, %s39
    %p41 = scmp.eq.s32.totalorder %s15, 0
    %p42 = por %p40, %p41
    %s44 = sadd.s32 %s43, 1
    %p47 = scmp.eq.s32.totalorder %s9, 1
    %p48 = scmp.ne.s32.totalorder %s43, %s45
    %p49 = scmp.eq.s32.totalorder %s9, 0
    %p50 = por %p48, %p49
    %p51 = scmp.ne.s32.totalorder %s43, %s45
    %p52 = scmp.eq.s32.totalorder %s14, 1
    %p53 = por %p51, %p52
    %p54 = scmp.ne.s32.totalorder %s45, %s46
    %p55 = scmp.eq.s32.totalorder %s14, 0
    %p56 = por %p54, %p55
    %p57 = scmp.ne.s32.totalorder %s45, %s46
    %p58 = scmp.eq.s32.totalorder %s15, 1
    %p59 = por %p57, %p58
    %p61 = scmp.ne.s32.totalorder %s46, %s60
    %p62 = scmp.eq.s32.totalorder %s15, 0
    %p63 = por %p61, %p62
    %s65 = sadd.s32 %s64, 1
    %p68 = scmp.eq.s32.totalorder %s9, 1
    %p69 = scmp.ne.s32.totalorder %s64, %s66
    %p70 = scmp.eq.s32.totalorder %s9, 0
    %p71 = por %p69, %p70
    %p72 = scmp.ne.s32.totalorder %s64, %s66
    %p73 = scmp.eq.s32.totalorder %s14, 1
    %p74 = por %p72, %p73
    %p75 = scmp.ne.s32.totalorder %s66, %s67
    %p76 = scmp.eq.s32.totalorder %s14, 0
    %p77 = por %p75, %p76
    %p78 = scmp.ne.s32.totalorder %s66, %s67
    %p79 = scmp.eq.s32.totalorder %s15, 1
    %p80 = por %p78, %p79
    %p82 = scmp.ne.s32.totalorder %s67, %s81
    %p83 = scmp.eq.s32.totalorder %s15, 0
    %p84 = por %p82, %p83
    %s85 = ssub.s32 %s9, %s16
    %p86 = scmp.eq.s32.totalorder %s85, 0
    %s88 = sadd.s32 %s87, 1
    %s89 = scalar_select %p86, %s87, %s88
    %p92 = pneg %p86
    %p93 = scmp.eq.s32.totalorder %s9, 1
    %p94 = por %p92, %p93
    %p95 = scmp.ne.s32.totalorder %s87, %s90
    %p96 = scmp.eq.s32.totalorder %s9, 0
    %p97 = por %p95, %p96
    %p98 = scmp.ne.s32.totalorder %s87, %s90
    %p99 = scmp.eq.s32.totalorder %s14, 1
    %p100 = por %p98, %p99
    %p101 = scmp.ne.s32.totalorder %s90, %s91
    %p102 = scmp.eq.s32.totalorder %s14, 0
    %p103 = por %p101, %p102
    %p104 = scmp.ne.s32.totalorder %s90, %s91
    %p105 = scmp.eq.s32.totalorder %s15, 1
    %p106 = por %p104, %p105
    %p108 = scmp.ne.s32.totalorder %s91, %s107
    %p109 = scmp.eq.s32.totalorder %s15, 0
    %p110 = por %p108, %p109
    %p111 = scmp.le.s32.totalorder 1, %s9
    %p112 = scmp.lt.s32.totalorder %s9, 3
    %p113 = pnand %p111, %p112
    %p114 = pneg %p113
    // Predicated region
    $region9: #{residual_block_forward.5} parent=5 // pred_check
      _
    $region10: #{residual_block_forward.5} parent=5 // pred_check_branch
      %116 = sbr.rel (%p113) target = $region12
    $region11: #{residual_block_forward.5} parent=5 // pred_region
      %s117 = ssub.s32 %s9, 1
      // Predicated region
      $region13: #{residual_block_forward.5} parent=11 // pred_check
        %p118 = pneg %p56
      $region14: #{residual_block_forward.5} parent=11 // pred_check_branch
        %120 = sbr.rel (%p118) target = $region16
      $region15: #{residual_block_forward.5} parent=11 // pred_region
        _
      $region16: #{residual_block_forward.5} parent=11 // pred_fallthru
        _
      // Predicated region
      $region17: #{residual_block_forward.5} parent=11 // pred_check
        %p121 = pneg %p77
      $region18: #{residual_block_forward.5} parent=11 // pred_check_branch
        %123 = sbr.rel (%p121) target = $region20
      $region19: #{residual_block_forward.5} parent=11 // pred_region
        _
      $region20: #{residual_block_forward.5} parent=11 // pred_fallthru
        _
    $region12: #{residual_block_forward.5} parent=5 // pred_fallthru
      _
    %p124 = scmp.lt.s32.totalorder %s9, 2
    // Predicated region
    $region21: #{residual_block_forward.5} parent=5 // pred_check
      %p125 = pneg %p124
    $region22: #{residual_block_forward.5} parent=5 // pred_check_branch
      %127 = sbr.rel (%p125) target = $region24
    $region23: #{residual_block_forward.5} parent=5 // pred_region
      // Predicated region
      $region25: #{residual_block_forward.5} parent=23 // pred_check
        %p128 = pneg %p29
      $region26: #{residual_block_forward.5} parent=23 // pred_check_branch
        %130 = sbr.rel (%p128) target = $region28
      $region27: #{residual_block_forward.5} parent=23 // pred_region
        %s131 = smul.u32 8, %s9
        %p132 = scmp.lt.s32.totalorder %s131, 15
        %s133 = scalar_select %p132, %s131, 15
        %s134 = smul.addr %s133, 8
        %s135 = scalar_lea.vmem %s0, %s134
        %s136 = smul.u32 8, %s9
      $region28: #{residual_block_forward.5} parent=23 // pred_fallthru
        _
    $region24: #{residual_block_forward.5} parent=5 // pred_fallthru
      _
    %p137 = scmp.le.s32.totalorder 1, %s9
    %p138 = scmp.lt.s32.totalorder %s9, 3
    %p139 = pnand %p137, %p138
    %p140 = pneg %p139
    // Predicated region
    $region29: #{residual_block_forward.5} parent=5 // pred_check
      _
    $region30: #{residual_block_forward.5} parent=5 // pred_check_branch
      %142 = sbr.rel (%p139) target = $region32
    $region31: #{residual_block_forward.5} parent=5 // pred_region
      %s143 = ssub.s32 %s9, 1
      %s144 = smul.u32 8, %s14
      %p145 = scmp.lt.s32.totalorder %s144, 15
      %s146 = scalar_select %p145, %s144, 15
      %s147 = smul.addr %s146, 8
      %s148 = scalar_lea.vmem %s0, %s147
      %p149 = pneg %p35
      %p150 = pneg %p32
      %p151 = pneg %p56
      %p152 = pneg %p53
      %p153 = pneg %p77
      %p154 = pneg %p74
      %p155 = pneg %p103
      %p156 = pneg %p100
      %s157 = smul.u32 8, %s14
      %p158 = scmp.lt.s32.totalorder %s157, 15
      %s159 = scalar_select %p158, %s157, 15
      %s160 = smul.addr %s159, 8
      %s161 = scalar_lea.vmem %s3, %s160
      %s162 = smul.u32 8, %s14
      %p163 = scmp.lt.s32.totalorder %s162, 15
      %s164 = scalar_select %p163, %s162, 15
      %s165 = smul.addr %s164, 8
      %s166 = scalar_lea.vmem %s0, %s165
      %s167 = smul.u32 8, %s14
      %s168 = smul.u32 8, %s14
      %p169 = scmp.lt.s32.totalorder %s168, 15
      %s170 = scalar_select %p169, %s168, 15
      %s171 = smul.addr %s170, 8
      %s172 = scalar_lea.vmem %s3, %s171
      %s173 = smul.u32 8, %s14
      %v174 = vld [vmem:[%s166] sm:$0xff]
      %v175 = vld [vmem:[%s166 + $0x8] sm:$0xff]
      %v176 = vld [vmem:[%s166 + $0x10] sm:$0xff]
      %v177 = vld [vmem:[%s166 + $0x18] sm:$0xff]
      %v178 = vld [vmem:[%s166 + $0x20] sm:$0xff]
      %v179 = vld [vmem:[%s166 + $0x28] sm:$0xff]
      %v180 = vld [vmem:[%s166 + $0x30] sm:$0xff]
      %v181 = vld [vmem:[%s166 + $0x38] sm:$0xff]
      %v182 = vld [vmem:[%s1] sm:$0x1]
      %v184 = vlaneseq
      %v185 = vshrl.u32 %v184, 7
      %v186 = vsub.s32 0, %v185
      %v187 = vrot.slane %v182, %v186
      %v189 = vmul.f32 %v174, %v187
      %v190 = vmul.f32 %v175, %v187
      %v191 = vmul.f32 %v176, %v187
      %v192 = vmul.f32 %v177, %v187
      %v193 = vmul.f32 %v178, %v187
      %v194 = vmul.f32 %v179, %v187
      %v195 = vmul.f32 %v180, %v187
      %v196 = vmul.f32 %v181, %v187
      %v197 = vld [vmem:[%s2] sm:$0x1]
      %v199 = vlaneseq
      %v200 = vshrl.u32 %v199, 7
      %v201 = vsub.s32 0, %v200
      %v202 = vrot.slane %v197, %v201
      %v204 = vadd.f32 %v189, %v202
      %v205 = vadd.f32 %v190, %v202
      %v206 = vadd.f32 %v191, %v202
      %v207 = vadd.f32 %v192, %v202
      %v208 = vadd.f32 %v193, %v202
      %v209 = vadd.f32 %v194, %v202
      %v210 = vadd.f32 %v195, %v202
      %v211 = vadd.f32 %v196, %v202
      %v212 = vmin.f32 %v204, 0.0
      %v213 = vmin.f32 %v205, 0.0
      %v214 = vmin.f32 %v206, 0.0
      %v215 = vmin.f32 %v207, 0.0
      %v216 = vmin.f32 %v208, 0.0
      %v217 = vmin.f32 %v209, 0.0
      %v218 = vmin.f32 %v210, 0.0
      %v219 = vmin.f32 %v211, 0.0
      %v220 = vmul.f32 %v212, 1.442695
      %v221 = vpow.pop %v220
      %v222 = vmul.f32 %v213, 1.442695
      %v223 = vpow.pop %v222
      %v224 = vmul.f32 %v214, 1.442695
      %v225 = vpow.pop %v224
      %v226 = vmul.f32 %v215, 1.442695
      %v227 = vpow.pop %v226
      %v228 = vmul.f32 %v216, 1.442695
      %v229 = vpow.pop %v228
      %v230 = vmul.f32 %v217, 1.442695
      %v231 = vpow.pop %v230
      %v232 = vmul.f32 %v218, 1.442695
      %v233 = vpow.pop %v232
      %v234 = vmul.f32 %v219, 1.442695
      %v235 = vpow.pop %v234
      %v236 = vsub.f32 %v221, 1.0
      %v237 = vsub.f32 %v223, 1.0
      %v238 = vsub.f32 %v225, 1.0
      %v239 = vsub.f32 %v227, 1.0
      %v240 = vsub.f32 %v229, 1.0
      %v241 = vsub.f32 %v231, 1.0
      %v242 = vsub.f32 %v233, 1.0
      %v243 = vsub.f32 %v235, 1.0
      %v244 = vmul.f32 %v236, 1.6732632
      %v245 = vmul.f32 %v237, 1.6732632
      %v246 = vmul.f32 %v238, 1.6732632
      %v247 = vmul.f32 %v239, 1.6732632
      %v248 = vmul.f32 %v240, 1.6732632
      %v249 = vmul.f32 %v241, 1.6732632
      %v250 = vmul.f32 %v242, 1.6732632
      %v251 = vmul.f32 %v243, 1.6732632
      %vm252 = vcmp.gt.f32.partialorder %v204, 0.0
      %vm253 = vcmp.gt.f32.partialorder %v205, 0.0
      %vm254 = vcmp.gt.f32.partialorder %v206, 0.0
      %vm255 = vcmp.gt.f32.partialorder %v207, 0.0
      %vm256 = vcmp.gt.f32.partialorder %v208, 0.0
      %vm257 = vcmp.gt.f32.partialorder %v209, 0.0
      %vm258 = vcmp.gt.f32.partialorder %v210, 0.0
      %vm259 = vcmp.gt.f32.partialorder %v211, 0.0
      %v260 = vsel %vm252, %v204, %v244
      %v261 = vsel %vm253, %v205, %v245
      %v262 = vsel %vm254, %v206, %v246
      %v263 = vsel %vm255, %v207, %v247
      %v264 = vsel %vm256, %v208, %v248
      %v265 = vsel %vm257, %v209, %v249
      %v266 = vsel %vm258, %v210, %v250
      %v267 = vsel %vm259, %v211, %v251
      %v268 = vmul.f32 %v260, 1.050701
      %v269 = vmul.f32 %v261, 1.050701
      %v270 = vmul.f32 %v262, 1.050701
      %v271 = vmul.f32 %v263, 1.050701
      %v272 = vmul.f32 %v264, 1.050701
      %v273 = vmul.f32 %v265, 1.050701
      %v274 = vmul.f32 %v266, 1.050701
      %v275 = vmul.f32 %v267, 1.050701
      %276 = vst [vmem:[%s172] sm:$0xff] %v268
      %277 = vst [vmem:[%s172 + $0x8] sm:$0xff] %v269
      %278 = vst [vmem:[%s172 + $0x10] sm:$0xff] %v270
      %279 = vst [vmem:[%s172 + $0x18] sm:$0xff] %v271
      %280 = vst [vmem:[%s172 + $0x20] sm:$0xff] %v272
      %281 = vst [vmem:[%s172 + $0x28] sm:$0xff] %v273
      %282 = vst [vmem:[%s172 + $0x30] sm:$0xff] %v274
      %283 = vst [vmem:[%s172 + $0x38] sm:$0xff] %v275
      %s284 = smul.u32 8, %s14
      %p285 = scmp.lt.s32.totalorder %s284, 15
      %s286 = scalar_select %p285, %s284, 15
      %s287 = smul.addr %s286, 8
      %s288 = scalar_lea.vmem %s3, %s287
      // Predicated region
      $region33: #{residual_block_forward.5} parent=31 // pred_check
        %p289 = pneg %p100
      $region34: #{residual_block_forward.5} parent=31 // pred_check_branch
        %291 = sbr.rel (%p289) target = $region36
      $region35: #{residual_block_forward.5} parent=31 // pred_region
        %s292 = smul.u32 8, %s14
      $region36: #{residual_block_forward.5} parent=31 // pred_fallthru
        _
    $region32: #{residual_block_forward.5} parent=5 // pred_fallthru
      _
    %p293 = scmp.le.s32.totalorder 2, %s9
    // Predicated region
    $region37: #{residual_block_forward.5} parent=5 // pred_check
      %p294 = pneg %p293
    $region38: #{residual_block_forward.5} parent=5 // pred_check_branch
      %296 = sbr.rel (%p294) target = $region40
    $region39: #{residual_block_forward.5} parent=5 // pred_region
      %s297 = ssub.s32 %s9, 2
      // Predicated region
      $region41: #{residual_block_forward.5} parent=39 // pred_check
        %p298 = pneg %p106
      $region42: #{residual_block_forward.5} parent=39 // pred_check_branch
        %300 = sbr.rel (%p298) target = $region44
      $region43: #{residual_block_forward.5} parent=39 // pred_region
        %s301 = smul.u32 8, %s15
        %p302 = scmp.lt.s32.totalorder %s301, 15
        %s303 = scalar_select %p302, %s301, 15
        %s304 = smul.addr %s303, 8
        %s305 = scalar_lea.vmem %s3, %s304
      $region44: #{residual_block_forward.5} parent=39 // pred_fallthru
        _
    $region40: #{residual_block_forward.5} parent=5 // pred_fallthru
      _
  $region6: #{residual_block_forward.5} parent=0 // loop_footer
    %s13 = sadd.s32 1, %s9
  $region7: #{residual_block_forward.5} parent=0 // loop_footer_branch
    %8 = sbr.rel target = $region3
  $region8: #{residual_block_forward.5} parent=0 // loop_exit
    _

// kernel: residual_block_forward.7
$region0: #{residual_block_forward.7}
  #allocation0 [shape = 'u32[]', space=smem, size = 0x4, offset = 0x4, fixed_abs, tag = 'smem constant byte address 0x4 - core index']
  #allocation1 [shape = 'u32[144,128]{1,0:T(1,128)}', space=vmem, size = 0x12000, scoped, tag = 'internal scratch']
  %s0 = inlined_call_operand.vmem [shape: f32[128,128], index: 0, kind: input, shape index: {}]
  %s1 = inlined_call_operand.vmem [shape: f32[1,128], index: 1, kind: input, shape index: {}]
  %s2 = inlined_call_operand.vmem [shape: f32[1,128], index: 2, kind: input, shape index: {}]
  %s3 = inlined_call_operand.vmem [shape: f32[128,128], index: 3, kind: input, shape index: {}]
  %s4 = inlined_call_operand.vmem [shape: f32[128,128], index: 4, kind: output, shape index: {}]
  %s5 = sld [smem:[#allocation0]]
  $region49: #{residual_block_forward.7} parent=0
    _
  %s7 = ssub.s32 1, %s5
  %s8 = scalar_select 0, %s7, %s5
  loop: start=0, step=1, limit=4
  $region2: #{residual_block_forward.7} parent=0 // loop_pre_header
    _
  $region3: #{residual_block_forward.7} parent=0 // loop_header
    %s10 = sphi 0, %s14
    %p11 = scmp.ge.s32.totalorder %s10, 4
    %s20 = sphi 0, %s22
    %s23 = sphi 0, %s20
    %s24 = sphi 0, %s23
    %s40 = sphi 0, %s24
    %s44 = sphi 0, %s44
    %s46 = sphi 0, %s44
    %s47 = sphi 0, %s46
    %s61 = sphi 0, %s47
    %s65 = sphi 0, %s65
    %s67 = sphi 0, %s65
    %s68 = sphi 0, %s67
    %s82 = sphi 0, %s68
    %s88 = sphi 0, %s90
    %s91 = sphi 0, %s88
    %s92 = sphi 0, %s91
    %s108 = sphi 0, %s92
    %s114 = sphi 0, %s116
    %s117 = sphi 0, %s114
    %s118 = sphi 0, %s117
    %s134 = sphi 0, %s118
  $region4: #{residual_block_forward.7} parent=0 // loop_header_branch
    %13 = sbr.rel (%p11) target = $region8
  $region5: #{residual_block_forward.7} parent=0 // loop_body
    %s15 = ssub.s32 %s10, 1
    %s16 = ssub.s32 %s10, 2
    %s17 = sadd.s32 %s10, 1
    %s18 = ssub.s32 %s10, %s17
    %p19 = scmp.eq.s32.totalorder %s18, 0
    %s21 = sadd.s32 %s20, 1
    %s22 = scalar_select %p19, %s20, %s21
    %p25 = pneg %p19
    %p26 = scmp.eq.s32.totalorder %s10, 1
    %p27 = por %p25, %p26
    %p28 = scmp.ne.s32.totalorder %s20, %s23
    %p29 = scmp.eq.s32.totalorder %s10, 0
    %p30 = por %p28, %p29
    %p31 = scmp.ne.s32.totalorder %s20, %s23
    %p32 = scmp.eq.s32.totalorder %s15, 1
    %p33 = por %p31, %p32
    %p34 = scmp.ne.s32.totalorder %s23, %s24
    %p35 = scmp.eq.s32.totalorder %s15, 0
    %p36 = por %p34, %p35
    %p37 = scmp.ne.s32.totalorder %s23, %s24
    %p38 = scmp.eq.s32.totalorder %s16, 1
    %p39 = por %p37, %p38
    %p41 = scmp.ne.s32.totalorder %s24, %s40
    %p42 = scmp.eq.s32.totalorder %s16, 0
    %p43 = por %p41, %p42
    %s45 = sadd.s32 %s44, 1
    %p48 = scmp.eq.s32.totalorder %s10, 1
    %p49 = scmp.ne.s32.totalorder %s44, %s46
    %p50 = scmp.eq.s32.totalorder %s10, 0
    %p51 = por %p49, %p50
    %p52 = scmp.ne.s32.totalorder %s44, %s46
    %p53 = scmp.eq.s32.totalorder %s15, 1
    %p54 = por %p52, %p53
    %p55 = scmp.ne.s32.totalorder %s46, %s47
    %p56 = scmp.eq.s32.totalorder %s15, 0
    %p57 = por %p55, %p56
    %p58 = scmp.ne.s32.totalorder %s46, %s47
    %p59 = scmp.eq.s32.totalorder %s16, 1
    %p60 = por %p58, %p59
    %p62 = scmp.ne.s32.totalorder %s47, %s61
    %p63 = scmp.eq.s32.totalorder %s16, 0
    %p64 = por %p62, %p63
    %s66 = sadd.s32 %s65, 1
    %p69 = scmp.eq.s32.totalorder %s10, 1
    %p70 = scmp.ne.s32.totalorder %s65, %s67
    %p71 = scmp.eq.s32.totalorder %s10, 0
    %p72 = por %p70, %p71
    %p73 = scmp.ne.s32.totalorder %s65, %s67
    %p74 = scmp.eq.s32.totalorder %s15, 1
    %p75 = por %p73, %p74
    %p76 = scmp.ne.s32.totalorder %s67, %s68
    %p77 = scmp.eq.s32.totalorder %s15, 0
    %p78 = por %p76, %p77
    %p79 = scmp.ne.s32.totalorder %s67, %s68
    %p80 = scmp.eq.s32.totalorder %s16, 1
    %p81 = por %p79, %p80
    %p83 = scmp.ne.s32.totalorder %s68, %s82
    %p84 = scmp.eq.s32.totalorder %s16, 0
    %p85 = por %p83, %p84
    %s86 = ssub.s32 %s10, %s17
    %p87 = scmp.eq.s32.totalorder %s86, 0
    %s89 = sadd.s32 %s88, 1
    %s90 = scalar_select %p87, %s88, %s89
    %p93 = pneg %p87
    %p94 = scmp.eq.s32.totalorder %s10, 1
    %p95 = por %p93, %p94
    %p96 = scmp.ne.s32.totalorder %s88, %s91
    %p97 = scmp.eq.s32.totalorder %s10, 0
    %p98 = por %p96, %p97
    %p99 = scmp.ne.s32.totalorder %s88, %s91
    %p100 = scmp.eq.s32.totalorder %s15, 1
    %p101 = por %p99, %p100
    %p102 = scmp.ne.s32.totalorder %s91, %s92
    %p103 = scmp.eq.s32.totalorder %s15, 0
    %p104 = por %p102, %p103
    %p105 = scmp.ne.s32.totalorder %s91, %s92
    %p106 = scmp.eq.s32.totalorder %s16, 1
    %p107 = por %p105, %p106
    %p109 = scmp.ne.s32.totalorder %s92, %s108
    %p110 = scmp.eq.s32.totalorder %s16, 0
    %p111 = por %p109, %p110
    %s112 = ssub.s32 %s10, %s17
    %p113 = scmp.eq.s32.totalorder %s112, 0
    %s115 = sadd.s32 %s114, 1
    %s116 = scalar_select %p113, %s114, %s115
    %p119 = pneg %p113
    %p120 = scmp.eq.s32.totalorder %s10, 1
    %p121 = por %p119, %p120
    %p122 = scmp.ne.s32.totalorder %s114, %s117
    %p123 = scmp.eq.s32.totalorder %s10, 0
    %p124 = por %p122, %p123
    %p125 = scmp.ne.s32.totalorder %s114, %s117
    %p126 = scmp.eq.s32.totalorder %s15, 1
    %p127 = por %p125, %p126
    %p128 = scmp.ne.s32.totalorder %s117, %s118
    %p129 = scmp.eq.s32.totalorder %s15, 0
    %p130 = por %p128, %p129
    %p131 = scmp.ne.s32.totalorder %s117, %s118
    %p132 = scmp.eq.s32.totalorder %s16, 1
    %p133 = por %p131, %p132
    %p135 = scmp.ne.s32.totalorder %s118, %s134
    %p136 = scmp.eq.s32.totalorder %s16, 0
    %p137 = por %p135, %p136
    %p138 = scmp.le.s32.totalorder 1, %s10
    %p139 = scmp.lt.s32.totalorder %s10, 3
    %p140 = pnand %p138, %p139
    %p141 = pneg %p140
    // Predicated region
    $region9: #{residual_block_forward.7} parent=5 // pred_check
      _
    $region10: #{residual_block_forward.7} parent=5 // pred_check_branch
      %143 = sbr.rel (%p140) target = $region12
    $region11: #{residual_block_forward.7} parent=5 // pred_region
      %s144 = ssub.s32 %s10, 1
      // Predicated region
      $region13: #{residual_block_forward.7} parent=11 // pred_check
        %p145 = pneg %p57
      $region14: #{residual_block_forward.7} parent=11 // pred_check_branch
        %147 = sbr.rel (%p145) target = $region16
      $region15: #{residual_block_forward.7} parent=11 // pred_region
        _
      $region16: #{residual_block_forward.7} parent=11 // pred_fallthru
        _
      // Predicated region
      $region17: #{residual_block_forward.7} parent=11 // pred_check
        %p148 = pneg %p78
      $region18: #{residual_block_forward.7} parent=11 // pred_check_branch
        %150 = sbr.rel (%p148) target = $region20
      $region19: #{residual_block_forward.7} parent=11 // pred_region
        _
      $region20: #{residual_block_forward.7} parent=11 // pred_fallthru
        _
    $region12: #{residual_block_forward.7} parent=5 // pred_fallthru
      _
    %p151 = scmp.lt.s32.totalorder %s10, 2
    // Predicated region
    $region21: #{residual_block_forward.7} parent=5 // pred_check
      %p152 = pneg %p151
    $region22: #{residual_block_forward.7} parent=5 // pred_check_branch
      %154 = sbr.rel (%p152) target = $region24
    $region23: #{residual_block_forward.7} parent=5 // pred_region
      // Predicated region
      $region25: #{residual_block_forward.7} parent=23 // pred_check
        %p155 = pneg %p30
      $region26: #{residual_block_forward.7} parent=23 // pred_check_branch
        %157 = sbr.rel (%p155) target = $region28
      $region27: #{residual_block_forward.7} parent=23 // pred_region
        %s158 = smul.u32 8, %s10
        %p159 = scmp.lt.s32.totalorder %s158, 15
        %s160 = scalar_select %p159, %s158, 15
        %s161 = smul.addr %s160, 8
        %s162 = scalar_lea.vmem %s0, %s161
        %s163 = smul.u32 8, %s10
      $region28: #{residual_block_forward.7} parent=23 // pred_fallthru
        _
      // Predicated region
      $region29: #{residual_block_forward.7} parent=23 // pred_check
        %p164 = pneg %p98
      $region30: #{residual_block_forward.7} parent=23 // pred_check_branch
        %166 = sbr.rel (%p164) target = $region32
      $region31: #{residual_block_forward.7} parent=23 // pred_region
        %s167 = smul.u32 8, %s10
        %p168 = scmp.lt.s32.totalorder %s167, 15
        %s169 = scalar_select %p168, %s167, 15
        %s170 = smul.addr %s169, 8
        %s171 = scalar_lea.vmem %s3, %s170
        %s172 = smul.u32 8, %s10
      $region32: #{residual_block_forward.7} parent=23 // pred_fallthru
        _
    $region24: #{residual_block_forward.7} parent=5 // pred_fallthru
      _
    %p173 = scmp.le.s32.totalorder 1, %s10
    %p174 = scmp.lt.s32.totalorder %s10, 3
    %p175 = pnand %p173, %p174
    %p176 = pneg %p175
    // Predicated region
    $region33: #{residual_block_forward.7} parent=5 // pred_check
      _
    $region34: #{residual_block_forward.7} parent=5 // pred_check_branch
      %178 = sbr.rel (%p175) target = $region36
    $region35: #{residual_block_forward.7} parent=5 // pred_region
      %s179 = ssub.s32 %s10, 1
      %s180 = smul.u32 8, %s15
      %p181 = scmp.lt.s32.totalorder %s180, 15
      %s182 = scalar_select %p181, %s180, 15
      %s183 = smul.addr %s182, 8
      %s184 = scalar_lea.vmem %s0, %s183
      %p185 = pneg %p36
      %p186 = pneg %p33
      %p187 = pneg %p57
      %p188 = pneg %p54
      %p189 = pneg %p78
      %p190 = pneg %p75
      %s191 = smul.u32 8, %s15
      %p192 = scmp.lt.s32.totalorder %s191, 15
      %s193 = scalar_select %p192, %s191, 15
      %s194 = smul.addr %s193, 8
      %s195 = scalar_lea.vmem %s3, %s194
      %p196 = pneg %p104
      %p197 = pneg %p101
      %p198 = pneg %p130
      %p199 = pneg %p127
      %s200 = smul.u32 8, %s15
      %p201 = scmp.lt.s32.totalorder %s200, 15
      %s202 = scalar_select %p201, %s200, 15
      %s203 = smul.addr %s202, 8
      %s204 = scalar_lea.vmem %s4, %s203
      %s205 = smul.u32 8, %s15
      %p206 = scmp.lt.s32.totalorder %s205, 15
      %s207 = scalar_select %p206, %s205, 15
      %s208 = smul.addr %s207, 8
      %s209 = scalar_lea.vmem %s0, %s208
      %s210 = smul.u32 8, %s15
      %s211 = smul.u32 8, %s15
      %p212 = scmp.lt.s32.totalorder %s211, 15
      %s213 = scalar_select %p212, %s211, 15
      %s214 = smul.addr %s213, 8
      %s215 = scalar_lea.vmem %s3, %s214
      %s216 = smul.u32 8, %s15
      %s217 = smul.u32 8, %s15
      %p218 = scmp.lt.s32.totalorder %s217, 15
      %s219 = scalar_select %p218, %s217, 15
      %s220 = smul.addr %s219, 8
      %s221 = scalar_lea.vmem %s4, %s220
      %s222 = smul.u32 8, %s15
      %v223 = vld [vmem:[%s209] sm:$0xff]
      %v224 = vld [vmem:[%s209 + $0x8] sm:$0xff]
      %v225 = vld [vmem:[%s209 + $0x10] sm:$0xff]
      %v226 = vld [vmem:[%s209 + $0x18] sm:$0xff]
      %v227 = vld [vmem:[%s209 + $0x20] sm:$0xff]
      %v228 = vld [vmem:[%s209 + $0x28] sm:$0xff]
      %v229 = vld [vmem:[%s209 + $0x30] sm:$0xff]
      %v230 = vld [vmem:[%s209 + $0x38] sm:$0xff]
      %v231 = vld [vmem:[%s1] sm:$0x1]
      %v233 = vlaneseq
      %v234 = vshrl.u32 %v233, 7
      %v235 = vsub.s32 0, %v234
      %v236 = vrot.slane %v231, %v235
      %v238 = vmul.f32 %v223, %v236
      %v239 = vmul.f32 %v224, %v236
      %v240 = vmul.f32 %v225, %v236
      %v241 = vmul.f32 %v226, %v236
      %v242 = vmul.f32 %v227, %v236
      %v243 = vmul.f32 %v228, %v236
      %v244 = vmul.f32 %v229, %v236
      %v245 = vmul.f32 %v230, %v236
      %v246 = vld [vmem:[%s2] sm:$0x1]
      %v248 = vlaneseq
      %v249 = vshrl.u32 %v248, 7
      %v250 = vsub.s32 0, %v249
      %v251 = vrot.slane %v246, %v250
      %v253 = vadd.f32 %v238, %v251
      %v254 = vadd.f32 %v239, %v251
      %v255 = vadd.f32 %v240, %v251
      %v256 = vadd.f32 %v241, %v251
      %v257 = vadd.f32 %v242, %v251
      %v258 = vadd.f32 %v243, %v251
      %v259 = vadd.f32 %v244, %v251
      %v260 = vadd.f32 %v245, %v251
      %v261 = vld [vmem:[%s215] sm:$0xff]
      %v262 = vld [vmem:[%s215 + $0x8] sm:$0xff]
      %v263 = vld [vmem:[%s215 + $0x10] sm:$0xff]
      %v264 = vld [vmem:[%s215 + $0x18] sm:$0xff]
      %v265 = vld [vmem:[%s215 + $0x20] sm:$0xff]
      %v266 = vld [vmem:[%s215 + $0x28] sm:$0xff]
      %v267 = vld [vmem:[%s215 + $0x30] sm:$0xff]
      %v268 = vld [vmem:[%s215 + $0x38] sm:$0xff]
      %v269 = vadd.f32 %v253, %v261
      %v270 = vadd.f32 %v254, %v262
      %v271 = vadd.f32 %v255, %v263
      %v272 = vadd.f32 %v256, %v264
      %v273 = vadd.f32 %v257, %v265
      %v274 = vadd.f32 %v258, %v266
      %v275 = vadd.f32 %v259, %v267
      %v276 = vadd.f32 %v260, %v268
      %v277 = vmin.f32 %v269, 0.0
      %v278 = vmin.f32 %v270, 0.0
      %v279 = vmin.f32 %v271, 0.0
      %v280 = vmin.f32 %v272, 0.0
      %v281 = vmin.f32 %v273, 0.0
      %v282 = vmin.f32 %v274, 0.0
      %v283 = vmin.f32 %v275, 0.0
      %v284 = vmin.f32 %v276, 0.0
      %v285 = vmul.f32 %v277, 1.442695
      %v286 = vpow.pop %v285
      %v287 = vmul.f32 %v278, 1.442695
      %v288 = vpow.pop %v287
      %v289 = vmul.f32 %v279, 1.442695
      %v290 = vpow.pop %v289
      %v291 = vmul.f32 %v280, 1.442695
      %v292 = vpow.pop %v291
      %v293 = vmul.f32 %v281, 1.442695
      %v294 = vpow.pop %v293
      %v295 = vmul.f32 %v282, 1.442695
      %v296 = vpow.pop %v295
      %v297 = vmul.f32 %v283, 1.442695
      %v298 = vpow.pop %v297
      %v299 = vmul.f32 %v284, 1.442695
      %v300 = vpow.pop %v299
      %v301 = vsub.f32 %v286, 1.0
      %v302 = vsub.f32 %v288, 1.0
      %v303 = vsub.f32 %v290, 1.0
      %v304 = vsub.f32 %v292, 1.0
      %v305 = vsub.f32 %v294, 1.0
      %v306 = vsub.f32 %v296, 1.0
      %v307 = vsub.f32 %v298, 1.0
      %v308 = vsub.f32 %v300, 1.0
      %v309 = vmul.f32 %v301, 1.6732632
      %v310 = vmul.f32 %v302, 1.6732632
      %v311 = vmul.f32 %v303, 1.6732632
      %v312 = vmul.f32 %v304, 1.6732632
      %v313 = vmul.f32 %v305, 1.6732632
      %v314 = vmul.f32 %v306, 1.6732632
      %v315 = vmul.f32 %v307, 1.6732632
      %v316 = vmul.f32 %v308, 1.6732632
      %vm317 = vcmp.gt.f32.partialorder %v269, 0.0
      %vm318 = vcmp.gt.f32.partialorder %v270, 0.0
      %vm319 = vcmp.gt.f32.partialorder %v271, 0.0
      %vm320 = vcmp.gt.f32.partialorder %v272, 0.0
      %vm321 = vcmp.gt.f32.partialorder %v273, 0.0
      %vm322 = vcmp.gt.f32.partialorder %v274, 0.0
      %vm323 = vcmp.gt.f32.partialorder %v275, 0.0
      %vm324 = vcmp.gt.f32.partialorder %v276, 0.0
      %v325 = vsel %vm317, %v269, %v309
      %v326 = vsel %vm318, %v270, %v310
      %v327 = vsel %vm319, %v271, %v311
      %v328 = vsel %vm320, %v272, %v312
      %v329 = vsel %vm321, %v273, %v313
      %v330 = vsel %vm322, %v274, %v314
      %v331 = vsel %vm323, %v275, %v315
      %v332 = vsel %vm324, %v276, %v316
      %v333 = vmul.f32 %v325, 1.050701
      %v334 = vmul.f32 %v326, 1.050701
      %v335 = vmul.f32 %v327, 1.050701
      %v336 = vmul.f32 %v328, 1.050701
      %v337 = vmul.f32 %v329, 1.050701
      %v338 = vmul.f32 %v330, 1.050701
      %v339 = vmul.f32 %v331, 1.050701
      %v340 = vmul.f32 %v332, 1.050701
      %341 = vst [vmem:[%s221] sm:$0xff] %v333
      %342 = vst [vmem:[%s221 + $0x8] sm:$0xff] %v334
      %343 = vst [vmem:[%s221 + $0x10] sm:$0xff] %v335
      %344 = vst [vmem:[%s221 + $0x18] sm:$0xff] %v336
      %345 = vst [vmem:[%s221 + $0x20] sm:$0xff] %v337
      %346 = vst [vmem:[%s221 + $0x28] sm:$0xff] %v338
      %347 = vst [vmem:[%s221 + $0x30] sm:$0xff] %v339
      %348 = vst [vmem:[%s221 + $0x38] sm:$0xff] %v340
      %s349 = smul.u32 8, %s15
      %p350 = scmp.lt.s32.totalorder %s349, 15
      %s351 = scalar_select %p350, %s349, 15
      %s352 = smul.addr %s351, 8
      %s353 = scalar_lea.vmem %s4, %s352
      // Predicated region
      $region37: #{residual_block_forward.7} parent=35 // pred_check
        %p354 = pneg %p127
      $region38: #{residual_block_forward.7} parent=35 // pred_check_branch
        %356 = sbr.rel (%p354) target = $region40
      $region39: #{residual_block_forward.7} parent=35 // pred_region
        %s357 = smul.u32 8, %s15
      $region40: #{residual_block_forward.7} parent=35 // pred_fallthru
        _
    $region36: #{residual_block_forward.7} parent=5 // pred_fallthru
      _
    %p358 = scmp.le.s32.totalorder 2, %s10
    // Predicated region
    $region41: #{residual_block_forward.7} parent=5 // pred_check
      %p359 = pneg %p358
    $region42: #{residual_block_forward.7} parent=5 // pred_check_branch
      %361 = sbr.rel (%p359) target = $region44
    $region43: #{residual_block_forward.7} parent=5 // pred_region
      %s362 = ssub.s32 %s10, 2
      // Predicated region
      $region45: #{residual_block_forward.7} parent=43 // pred_check
        %p363 = pneg %p133
      $region46: #{residual_block_forward.7} parent=43 // pred_check_branch
        %365 = sbr.rel (%p363) target = $region48
      $region47: #{residual_block_forward.7} parent=43 // pred_region
        %s366 = smul.u32 8, %s16
        %p367 = scmp.lt.s32.totalorder %s366, 15
        %s368 = scalar_select %p367, %s366, 15
        %s369 = smul.addr %s368, 8
        %s370 = scalar_lea.vmem %s4, %s369
      $region48: #{residual_block_forward.7} parent=43 // pred_fallthru
        _
    $region44: #{residual_block_forward.7} parent=5 // pred_fallthru
      _
  $region6: #{residual_block_forward.7} parent=0 // loop_footer
    %s14 = sadd.s32 1, %s10
  $region7: #{residual_block_forward.7} parent=0 // loop_footer_branch
    %9 = sbr.rel target = $region3
  $region8: #{residual_block_forward.7} parent=0 // loop_exit
    _

</llo_original>
